<compile_context>
chip_gen: v5e
topology: v5e:2x2
jax: 0.10.0
libtpu: 0.0.40
codegen_flags: <defaults>
</compile_context>

<pallas_src>
import functools

import jax
import jax.numpy as jnp
from jax import lax
from jax.experimental import pallas as pl
from jax.experimental.pallas import tpu as pltpu


def _round_up(x, m):
    return ((x + m - 1) // m) * m


def maml_kernel(sxe_ref, sy_ref, qxe_ref,
                w1e_ref, b1_ref, w2_ref, b2_ref,
                pred_ref, loss_ref,
                *, num_inner_loop, inner_lr, n_elems):
    """Inner-loop adaptation + query forward; adapted weights live in vregs."""
    sxe = sxe_ref[...]            # [T,  FE]  fused [support_x | emb/100 broadcast]
    sy  = sy_ref[...]             # [T,  Fp]
    w1e = w1e_ref[...]            # [FE, Hp]  fused [w1 ; we]
    b1  = b1_ref[...]             # [1,  Hp]
    w2  = w2_ref[...]             # [Hp, Fp]
    b2  = b2_ref[...]             # [1,  Fp]

    inv_n = 1.0 / n_elems

    if num_inner_loop == 0:       # trace-time guard; loss defaults to 0
        loss_ref[0, 0] = 0.0

    # Statically-unrolled inner adaptation loop (forward + analytic MSE backward
    # + SGD). Weights are plain values carried across iterations -> the LLO
    # scheduler keeps them resident; no load/store slot traffic per step.
    for step in range(num_inner_loop):
        h_pre = jnp.dot(sxe, w1e, preferred_element_type=jnp.float32) + b1    # [T,Hp]
        h = jnp.maximum(h_pre, 0.0)
        y = jnp.dot(h, w2, preferred_element_type=jnp.float32) + b2           # [T,Fp]
        diff = y - sy

        if step == num_inner_loop - 1:   # only the last step's loss is returned
            loss_ref[0, 0] = jnp.sum(diff * diff) * inv_n

        g_y = (2.0 * inv_n) * diff                                            # [T,Fp]
        # contractions over T expressed via dot_general (no explicit transposes)
        g_w2 = lax.dot_general(h, g_y, (((0,), (0,)), ((), ())),
                               preferred_element_type=jnp.float32)            # [Hp,Fp]
        g_b2 = jnp.sum(g_y, axis=0, keepdims=True)                            # [1,Fp]
        g_h = lax.dot_general(g_y, w2, (((1,), (1,)), ((), ())),
                              preferred_element_type=jnp.float32)             # [T,Hp]
        g_hpre = jnp.where(h_pre > 0.0, g_h, 0.0)
        g_w1e = lax.dot_general(sxe, g_hpre, (((0,), (0,)), ((), ())),
                                preferred_element_type=jnp.float32)           # [FE,Hp]
        g_b1 = jnp.sum(g_hpre, axis=0, keepdims=True)                         # [1,Hp]

        # inner SGD update (rows of w1e beyond [w1;we] stay zero: inputs there are 0)
        w1e = w1e - inner_lr * g_w1e
        b1 = b1 - inner_lr * g_b1
        w2 = w2 - inner_lr * g_w2
        b2 = b2 - inner_lr * g_b2

    # Query forward with adapted weights — one flattened lane-dense matmul pair.
    qxe = qxe_ref[...]                                                        # [QT,FE]
    hq = jnp.maximum(jnp.dot(qxe, w1e, preferred_element_type=jnp.float32) + b1, 0.0)
    pred_ref[...] = jnp.dot(hq, w2, preferred_element_type=jnp.float32) + b2  # [QT,Fp]


def maml_forward(support_x, support_y, emb, query_x, q_emb, params,
                 num_inner_loop=3, inner_lr=0.01):
    w1, we, b1, w2, b2 = [p.astype(jnp.float32) for p in params]
    T, F = support_x.shape
    Q, Tq, _ = query_x.shape
    E = emb.shape[-1]
    H = w1.shape[-1]

    LANE = 128
    Fp, Hp, Ep = _round_up(F, LANE), _round_up(H, LANE), _round_up(E, LANE)
    FE = Fp + Ep
    QT = Q * Tq

    def pad2(x, r, c):
        x = x.astype(jnp.float32)
        return jnp.pad(x, ((0, r - x.shape[0]), (0, c - x.shape[1])))

    # Fused, zero-padded inputs. Zero padding is numerically inert: padded input
    # columns are zero -> padded weight rows/cols receive zero gradients and stay
    # zero; padded output columns of (pred - support_y) are identically zero.
    e_row = pad2(emb / 100.0, 1, Ep)                                  # [1, Ep]
    sxe = jnp.concatenate(
        [pad2(support_x, T, Fp), jnp.broadcast_to(e_row, (T, Ep))], axis=1)   # [T, FE]
    sy_p = pad2(support_y, T, Fp)                                     # [T, Fp]

    qx_flat = pad2(query_x.reshape(QT, F), QT, Fp)                    # [QT, Fp]
    qe_rep = jnp.repeat(pad2(q_emb / 100.0, Q, Ep), Tq, axis=0)       # [QT, Ep]
    qxe = jnp.concatenate([qx_flat, qe_rep], axis=1)                  # [QT, FE]

    w1e = jnp.concatenate([pad2(w1, Fp, Hp), pad2(we, Ep, Hp)], axis=0)  # [FE, Hp]
    b1_p = pad2(b1, 1, Hp)
    w2_p = pad2(w2, Hp, Fp)
    b2_p = pad2(b2, 1, Fp)

    kern = functools.partial(maml_kernel,
                             num_inner_loop=int(num_inner_loop),
                             inner_lr=float(inner_lr),
                             n_elems=float(T * F))

    vmem = pl.BlockSpec(memory_space=pltpu.MemorySpace.VMEM)
    pred_flat, loss = pl.pallas_call(
        kern,
        out_shape=(jax.ShapeDtypeStruct((QT, Fp), jnp.float32),
                   jax.ShapeDtypeStruct((1, 1), jnp.float32)),
        in_specs=[vmem] * 7,
        out_specs=(vmem, pl.BlockSpec(memory_space=pltpu.MemorySpace.SMEM)),
    )(sxe, sy_p, qxe, w1e, b1_p, w2_p, b2_p)

    pred = pred_flat[:, :F].reshape(Q, Tq, F)
    return pred, loss[0, 0]


def maml_forward_ref(support_x, support_y, emb, query_x, q_emb, params,
                     num_inner_loop=3, inner_lr=0.01):
    """Pure-JAX reference (same math, unpadded, no Pallas)."""
    w1, we, b1, w2, b2 = [p.astype(jnp.float32) for p in params]
    e = emb / 100.0
    n = float(support_x.size)
    loss = jnp.float32(0.0)
    for _ in range(num_inner_loop):
        h_pre = support_x @ w1 + e @ we + b1
        h = jnp.maximum(h_pre, 0.0)
        y = h @ w2 + b2
        diff = y - support_y
        loss = jnp.sum(diff * diff) / n
        g_y = (2.0 / n) * diff
        g_w2 = h.T @ g_y
        g_b2 = jnp.sum(g_y, axis=0, keepdims=True)
        g_h = g_y @ w2.T
        g_hpre = g_h * (h_pre > 0.0)
        g_w1 = support_x.T @ g_hpre
        g_b1 = jnp.sum(g_hpre, axis=0, keepdims=True)
        g_we = e.T @ g_b1
        w1 = w1 - inner_lr * g_w1
        we = we - inner_lr * g_we
        b1 = b1 - inner_lr * g_b1
        w2 = w2 - inner_lr * g_w2
        b2 = b2 - inner_lr * g_b2
    qe = q_emb / 100.0
    hq = jnp.maximum(jnp.einsum('qtf,fh->qth', query_x, w1)
                     + (qe @ we)[:, None, :] + b1[None, :, :], 0.0)
    pred = jnp.einsum('qth,hf->qtf', hq, w2) + b2[None, :, :]
    return pred, loss


if __name__ == "__main__":
    key = jax.random.PRNGKey(0)
    T, F, H, E, Q, Tq = 16, 32, 32, 16, 2, 16
    ks = jax.random.split(key, 10)

    support_x = jax.random.normal(ks[0], (T, F), jnp.float32)
    support_y = jax.random.normal(ks[1], (T, F), jnp.float32)
    emb       = jax.random.normal(ks[2], (1, E), jnp.float32) * 10.0
    query_x   = jax.random.normal(ks[3], (Q, Tq, F), jnp.float32)
    q_emb     = jax.random.normal(ks[4], (Q, E), jnp.float32) * 10.0

    # deterministic synthetic "model" parameters
    w1 = jax.random.normal(ks[5], (F, H), jnp.float32) * 0.1
    we = jax.random.normal(ks[6], (E, H), jnp.float32) * 0.1
    b1 = jnp.zeros((1, H), jnp.float32)
    w2 = jax.random.normal(ks[7], (H, F), jnp.float32) * 0.1
    b2 = jnp.zeros((1, F), jnp.float32)
    params = (w1, we, b1, w2, b2)

    pred, loss = maml_forward(support_x, support_y, emb, query_x, q_emb,
                              params, num_inner_loop=3, inner_lr=0.01)
    pred = jax.block_until_ready(pred)
    loss = jax.block_until_ready(loss)

    pred_ref, loss_ref = maml_forward_ref(support_x, support_y, emb, query_x,
                                          q_emb, params,
                                          num_inner_loop=3, inner_lr=0.01)
    assert jnp.allclose(pred, pred_ref, atol=1e-4, rtol=1e-3)
    assert jnp.allclose(loss, loss_ref, atol=1e-4, rtol=1e-3)
    print("KERNEL_OK")
</pallas_src>

<mosaic_0001>
module attributes {stable_mosaic.version = 11 : i64} {
  func.func @maml_kernel(%arg0: memref<16x256xf32, #tpu.memory_space<vmem>>, %arg1: memref<16x128xf32, #tpu.memory_space<vmem>>, %arg2: memref<32x256xf32, #tpu.memory_space<vmem>>, %arg3: memref<256x128xf32, #tpu.memory_space<vmem>>, %arg4: memref<1x128xf32, #tpu.memory_space<vmem>>, %arg5: memref<128x128xf32, #tpu.memory_space<vmem>>, %arg6: memref<1x128xf32, #tpu.memory_space<vmem>>, %arg7: memref<32x128xf32, #tpu.memory_space<vmem>>, %arg8: memref<1x1xf32, #tpu.memory_space<smem>>) attributes {dimension_semantics = [], scalar_prefetch = 0 : i64, scratch_operands = 0 : i64, tpu.core_type = #tpu.core_type<tc>} {
    %c0 = arith.constant 0 : index
    %c0_0 = arith.constant 0 : index
    %0 = vector.load %arg0[%c0, %c0_0] : memref<16x256xf32, #tpu.memory_space<vmem>>, vector<16x256xf32>
    %c0_1 = arith.constant 0 : index
    %c0_2 = arith.constant 0 : index
    %1 = vector.load %arg1[%c0_1, %c0_2] : memref<16x128xf32, #tpu.memory_space<vmem>>, vector<16x128xf32>
    %c0_3 = arith.constant 0 : index
    %c0_4 = arith.constant 0 : index
    %2 = vector.load %arg3[%c0_3, %c0_4] : memref<256x128xf32, #tpu.memory_space<vmem>>, vector<256x128xf32>
    %c0_5 = arith.constant 0 : index
    %c0_6 = arith.constant 0 : index
    %3 = vector.load %arg4[%c0_5, %c0_6] : memref<1x128xf32, #tpu.memory_space<vmem>>, vector<1x128xf32>
    %c0_7 = arith.constant 0 : index
    %c0_8 = arith.constant 0 : index
    %4 = vector.load %arg5[%c0_7, %c0_8] : memref<128x128xf32, #tpu.memory_space<vmem>>, vector<128x128xf32>
    %c0_9 = arith.constant 0 : index
    %c0_10 = arith.constant 0 : index
    %5 = vector.load %arg6[%c0_9, %c0_10] : memref<1x128xf32, #tpu.memory_space<vmem>>, vector<1x128xf32>
    %cst = arith.constant dense<0.000000e+00> : vector<16x128xf32>
    %6 = tpu.matmul %0, %2, %cst {dimension_numbers = #tpu.dot_dimension_numbers<[1], [0], [0], [1], [0, 0, 1, 1], [], []>} : vector<16x256xf32>, vector<256x128xf32>, vector<16x128xf32> -> vector<16x128xf32>
    %7 = vector.broadcast %3 : vector<1x128xf32> to vector<16x128xf32>
    %8 = arith.addf %6, %7 : vector<16x128xf32>
    %cst_11 = arith.constant 0.000000e+00 : f32
    %9 = vector.broadcast %cst_11 : f32 to vector<16x128xf32>
    %10 = arith.maximumf %8, %9 : vector<16x128xf32>
    %cst_12 = arith.constant dense<0.000000e+00> : vector<16x128xf32>
    %11 = tpu.matmul %10, %4, %cst_12 {dimension_numbers = #tpu.dot_dimension_numbers<[1], [0], [0], [1], [0, 0, 1, 1], [], []>} : vector<16x128xf32>, vector<128x128xf32>, vector<16x128xf32> -> vector<16x128xf32>
    %12 = vector.broadcast %5 : vector<1x128xf32> to vector<16x128xf32>
    %13 = arith.addf %11, %12 : vector<16x128xf32>
    %14 = arith.subf %13, %1 : vector<16x128xf32>
    %cst_13 = arith.constant 3.906250e-03 : f32
    %15 = vector.broadcast %cst_13 : f32 to vector<16x128xf32>
    %16 = arith.mulf %15, %14 : vector<16x128xf32>
    %cst_14 = arith.constant dense<0.000000e+00> : vector<128x128xf32>
    %17 = tpu.matmul %10, %16, %cst_14 {dimension_numbers = #tpu.dot_dimension_numbers<[0], [0], [1], [1], [0, 1, 1, 1], [], []>} : vector<16x128xf32>, vector<16x128xf32>, vector<128x128xf32> -> vector<128x128xf32>
    %cst_15 = arith.constant dense<0.000000e+00> : vector<128xf32>
    %18 = vector.multi_reduction <add>, %16, %cst_15 [0] : vector<16x128xf32> to vector<128xf32>
    %19 = vector.shape_cast %18 : vector<128xf32> to vector<1x128xf32>
    %cst_16 = arith.constant dense<0.000000e+00> : vector<16x128xf32>
    %20 = tpu.matmul %16, %4, %cst_16 {dimension_numbers = #tpu.dot_dimension_numbers<[1], [1], [0], [0], [0, 0, 1, 0], [], []>} : vector<16x128xf32>, vector<128x128xf32>, vector<16x128xf32> -> vector<16x128xf32>
    %cst_17 = arith.constant 0.000000e+00 : f32
    %21 = vector.broadcast %cst_17 : f32 to vector<16x128xf32>
    %22 = arith.cmpf ogt, %8, %21 : vector<16x128xf32>
    %cst_18 = arith.constant 0.000000e+00 : f32
    %23 = vector.broadcast %cst_18 : f32 to vector<16x128xf32>
    %24 = arith.select %22, %20, %23 : vector<16x128xi1>, vector<16x128xf32>
    %cst_19 = arith.constant dense<0.000000e+00> : vector<256x128xf32>
    %25 = tpu.matmul %0, %24, %cst_19 {dimension_numbers = #tpu.dot_dimension_numbers<[0], [0], [1], [1], [0, 1, 1, 1], [], []>} : vector<16x256xf32>, vector<16x128xf32>, vector<256x128xf32> -> vector<256x128xf32>
    %cst_20 = arith.constant dense<0.000000e+00> : vector<128xf32>
    %26 = vector.multi_reduction <add>, %24, %cst_20 [0] : vector<16x128xf32> to vector<128xf32>
    %27 = vector.shape_cast %26 : vector<128xf32> to vector<1x128xf32>
    %cst_21 = arith.constant 0.00999999977 : f32
    %28 = vector.broadcast %cst_21 : f32 to vector<256x128xf32>
    %29 = arith.mulf %28, %25 : vector<256x128xf32>
    %30 = arith.subf %2, %29 : vector<256x128xf32>
    %cst_22 = arith.constant 0.00999999977 : f32
    %31 = vector.broadcast %cst_22 : f32 to vector<1x128xf32>
    %32 = arith.mulf %31, %27 : vector<1x128xf32>
    %33 = arith.subf %3, %32 : vector<1x128xf32>
    %cst_23 = arith.constant 0.00999999977 : f32
    %34 = vector.broadcast %cst_23 : f32 to vector<128x128xf32>
    %35 = arith.mulf %34, %17 : vector<128x128xf32>
    %36 = arith.subf %4, %35 : vector<128x128xf32>
    %cst_24 = arith.constant 0.00999999977 : f32
    %37 = vector.broadcast %cst_24 : f32 to vector<1x128xf32>
    %38 = arith.mulf %37, %19 : vector<1x128xf32>
    %39 = arith.subf %5, %38 : vector<1x128xf32>
    %cst_25 = arith.constant dense<0.000000e+00> : vector<16x128xf32>
    %40 = tpu.matmul %0, %30, %cst_25 {dimension_numbers = #tpu.dot_dimension_numbers<[1], [0], [0], [1], [0, 0, 1, 1], [], []>} : vector<16x256xf32>, vector<256x128xf32>, vector<16x128xf32> -> vector<16x128xf32>
    %41 = vector.broadcast %33 : vector<1x128xf32> to vector<16x128xf32>
    %42 = arith.addf %40, %41 : vector<16x128xf32>
    %cst_26 = arith.constant 0.000000e+00 : f32
    %43 = vector.broadcast %cst_26 : f32 to vector<16x128xf32>
    %44 = arith.maximumf %42, %43 : vector<16x128xf32>
    %cst_27 = arith.constant dense<0.000000e+00> : vector<16x128xf32>
    %45 = tpu.matmul %44, %36, %cst_27 {dimension_numbers = #tpu.dot_dimension_numbers<[1], [0], [0], [1], [0, 0, 1, 1], [], []>} : vector<16x128xf32>, vector<128x128xf32>, vector<16x128xf32> -> vector<16x128xf32>
    %46 = vector.broadcast %39 : vector<1x128xf32> to vector<16x128xf32>
    %47 = arith.addf %45, %46 : vector<16x128xf32>
    %48 = arith.subf %47, %1 : vector<16x128xf32>
    %cst_28 = arith.constant 3.906250e-03 : f32
    %49 = vector.broadcast %cst_28 : f32 to vector<16x128xf32>
    %50 = arith.mulf %49, %48 : vector<16x128xf32>
    %cst_29 = arith.constant dense<0.000000e+00> : vector<128x128xf32>
    %51 = tpu.matmul %44, %50, %cst_29 {dimension_numbers = #tpu.dot_dimension_numbers<[0], [0], [1], [1], [0, 1, 1, 1], [], []>} : vector<16x128xf32>, vector<16x128xf32>, vector<128x128xf32> -> vector<128x128xf32>
    %cst_30 = arith.constant dense<0.000000e+00> : vector<128xf32>
    %52 = vector.multi_reduction <add>, %50, %cst_30 [0] : vector<16x128xf32> to vector<128xf32>
    %53 = vector.shape_cast %52 : vector<128xf32> to vector<1x128xf32>
    %cst_31 = arith.constant dense<0.000000e+00> : vector<16x128xf32>
    %54 = tpu.matmul %50, %36, %cst_31 {dimension_numbers = #tpu.dot_dimension_numbers<[1], [1], [0], [0], [0, 0, 1, 0], [], []>} : vector<16x128xf32>, vector<128x128xf32>, vector<16x128xf32> -> vector<16x128xf32>
    %cst_32 = arith.constant 0.000000e+00 : f32
    %55 = vector.broadcast %cst_32 : f32 to vector<16x128xf32>
    %56 = arith.cmpf ogt, %42, %55 : vector<16x128xf32>
    %cst_33 = arith.constant 0.000000e+00 : f32
    %57 = vector.broadcast %cst_33 : f32 to vector<16x128xf32>
    %58 = arith.select %56, %54, %57 : vector<16x128xi1>, vector<16x128xf32>
    %cst_34 = arith.constant dense<0.000000e+00> : vector<256x128xf32>
    %59 = tpu.matmul %0, %58, %cst_34 {dimension_numbers = #tpu.dot_dimension_numbers<[0], [0], [1], [1], [0, 1, 1, 1], [], []>} : vector<16x256xf32>, vector<16x128xf32>, vector<256x128xf32> -> vector<256x128xf32>
    %cst_35 = arith.constant dense<0.000000e+00> : vector<128xf32>
    %60 = vector.multi_reduction <add>, %58, %cst_35 [0] : vector<16x128xf32> to vector<128xf32>
    %61 = vector.shape_cast %60 : vector<128xf32> to vector<1x128xf32>
    %cst_36 = arith.constant 0.00999999977 : f32
    %62 = vector.broadcast %cst_36 : f32 to vector<256x128xf32>
    %63 = arith.mulf %62, %59 : vector<256x128xf32>
    %64 = arith.subf %30, %63 : vector<256x128xf32>
    %cst_37 = arith.constant 0.00999999977 : f32
    %65 = vector.broadcast %cst_37 : f32 to vector<1x128xf32>
    %66 = arith.mulf %65, %61 : vector<1x128xf32>
    %67 = arith.subf %33, %66 : vector<1x128xf32>
    %cst_38 = arith.constant 0.00999999977 : f32
    %68 = vector.broadcast %cst_38 : f32 to vector<128x128xf32>
    %69 = arith.mulf %68, %51 : vector<128x128xf32>
    %70 = arith.subf %36, %69 : vector<128x128xf32>
    %cst_39 = arith.constant 0.00999999977 : f32
    %71 = vector.broadcast %cst_39 : f32 to vector<1x128xf32>
    %72 = arith.mulf %71, %53 : vector<1x128xf32>
    %73 = arith.subf %39, %72 : vector<1x128xf32>
    %cst_40 = arith.constant dense<0.000000e+00> : vector<16x128xf32>
    %74 = tpu.matmul %0, %64, %cst_40 {dimension_numbers = #tpu.dot_dimension_numbers<[1], [0], [0], [1], [0, 0, 1, 1], [], []>} : vector<16x256xf32>, vector<256x128xf32>, vector<16x128xf32> -> vector<16x128xf32>
    %75 = vector.broadcast %67 : vector<1x128xf32> to vector<16x128xf32>
    %76 = arith.addf %74, %75 : vector<16x128xf32>
    %cst_41 = arith.constant 0.000000e+00 : f32
    %77 = vector.broadcast %cst_41 : f32 to vector<16x128xf32>
    %78 = arith.maximumf %76, %77 : vector<16x128xf32>
    %cst_42 = arith.constant dense<0.000000e+00> : vector<16x128xf32>
    %79 = tpu.matmul %78, %70, %cst_42 {dimension_numbers = #tpu.dot_dimension_numbers<[1], [0], [0], [1], [0, 0, 1, 1], [], []>} : vector<16x128xf32>, vector<128x128xf32>, vector<16x128xf32> -> vector<16x128xf32>
    %80 = vector.broadcast %73 : vector<1x128xf32> to vector<16x128xf32>
    %81 = arith.addf %79, %80 : vector<16x128xf32>
    %82 = arith.subf %81, %1 : vector<16x128xf32>
    %83 = arith.mulf %82, %82 : vector<16x128xf32>
    %84 = vector.shape_cast %83 : vector<16x128xf32> to vector<1x16x128xf32>
    %cst_43 = arith.constant dense<0.000000e+00> : vector<1xf32>
    %85 = vector.multi_reduction <add>, %84, %cst_43 [1, 2] : vector<1x16x128xf32> to vector<1xf32>
    %86 = vector.shape_cast %85 : vector<1xf32> to vector<1x1x1xf32>
    %87 = vector.extract %86[0, 0, 0] : f32 from vector<1x1x1xf32>
    %cst_44 = arith.constant 0.001953125 : f32
    %88 = arith.mulf %87, %cst_44 : f32
    %c0_45 = arith.constant 0 : index
    %c0_46 = arith.constant 0 : index
    %89 = memref.load %arg8[%c0_45, %c0_46] : memref<1x1xf32, #tpu.memory_space<smem>>
    memref.store %88, %arg8[%c0_45, %c0_46] : memref<1x1xf32, #tpu.memory_space<smem>>
    %cst_47 = arith.constant 3.906250e-03 : f32
    %90 = vector.broadcast %cst_47 : f32 to vector<16x128xf32>
    %91 = arith.mulf %90, %82 : vector<16x128xf32>
    %cst_48 = arith.constant dense<0.000000e+00> : vector<128x128xf32>
    %92 = tpu.matmul %78, %91, %cst_48 {dimension_numbers = #tpu.dot_dimension_numbers<[0], [0], [1], [1], [0, 1, 1, 1], [], []>} : vector<16x128xf32>, vector<16x128xf32>, vector<128x128xf32> -> vector<128x128xf32>
    %cst_49 = arith.constant dense<0.000000e+00> : vector<128xf32>
    %93 = vector.multi_reduction <add>, %91, %cst_49 [0] : vector<16x128xf32> to vector<128xf32>
    %94 = vector.shape_cast %93 : vector<128xf32> to vector<1x128xf32>
    %cst_50 = arith.constant dense<0.000000e+00> : vector<16x128xf32>
    %95 = tpu.matmul %91, %70, %cst_50 {dimension_numbers = #tpu.dot_dimension_numbers<[1], [1], [0], [0], [0, 0, 1, 0], [], []>} : vector<16x128xf32>, vector<128x128xf32>, vector<16x128xf32> -> vector<16x128xf32>
    %cst_51 = arith.constant 0.000000e+00 : f32
    %96 = vector.broadcast %cst_51 : f32 to vector<16x128xf32>
    %97 = arith.cmpf ogt, %76, %96 : vector<16x128xf32>
    %cst_52 = arith.constant 0.000000e+00 : f32
    %98 = vector.broadcast %cst_52 : f32 to vector<16x128xf32>
    %99 = arith.select %97, %95, %98 : vector<16x128xi1>, vector<16x128xf32>
    %cst_53 = arith.constant dense<0.000000e+00> : vector<256x128xf32>
    %100 = tpu.matmul %0, %99, %cst_53 {dimension_numbers = #tpu.dot_dimension_numbers<[0], [0], [1], [1], [0, 1, 1, 1], [], []>} : vector<16x256xf32>, vector<16x128xf32>, vector<256x128xf32> -> vector<256x128xf32>
    %cst_54 = arith.constant dense<0.000000e+00> : vector<128xf32>
    %101 = vector.multi_reduction <add>, %99, %cst_54 [0] : vector<16x128xf32> to vector<128xf32>
    %102 = vector.shape_cast %101 : vector<128xf32> to vector<1x128xf32>
    %cst_55 = arith.constant 0.00999999977 : f32
    %103 = vector.broadcast %cst_55 : f32 to vector<256x128xf32>
    %104 = arith.mulf %103, %100 : vector<256x128xf32>
    %105 = arith.subf %64, %104 : vector<256x128xf32>
    %cst_56 = arith.constant 0.00999999977 : f32
    %106 = vector.broadcast %cst_56 : f32 to vector<1x128xf32>
    %107 = arith.mulf %106, %102 : vector<1x128xf32>
    %108 = arith.subf %67, %107 : vector<1x128xf32>
    %cst_57 = arith.constant 0.00999999977 : f32
    %109 = vector.broadcast %cst_57 : f32 to vector<128x128xf32>
    %110 = arith.mulf %109, %92 : vector<128x128xf32>
    %111 = arith.subf %70, %110 : vector<128x128xf32>
    %cst_58 = arith.constant 0.00999999977 : f32
    %112 = vector.broadcast %cst_58 : f32 to vector<1x128xf32>
    %113 = arith.mulf %112, %94 : vector<1x128xf32>
    %114 = arith.subf %73, %113 : vector<1x128xf32>
    %c0_59 = arith.constant 0 : index
    %c0_60 = arith.constant 0 : index
    %115 = vector.load %arg2[%c0_59, %c0_60] : memref<32x256xf32, #tpu.memory_space<vmem>>, vector<32x256xf32>
    %cst_61 = arith.constant dense<0.000000e+00> : vector<32x128xf32>
    %116 = tpu.matmul %115, %105, %cst_61 {dimension_numbers = #tpu.dot_dimension_numbers<[1], [0], [0], [1], [0, 0, 1, 1], [], []>} : vector<32x256xf32>, vector<256x128xf32>, vector<32x128xf32> -> vector<32x128xf32>
    %117 = vector.broadcast %108 : vector<1x128xf32> to vector<32x128xf32>
    %118 = arith.addf %116, %117 : vector<32x128xf32>
    %cst_62 = arith.constant 0.000000e+00 : f32
    %119 = vector.broadcast %cst_62 : f32 to vector<32x128xf32>
    %120 = arith.maximumf %118, %119 : vector<32x128xf32>
    %cst_63 = arith.constant dense<0.000000e+00> : vector<32x128xf32>
    %121 = tpu.matmul %120, %111, %cst_63 {dimension_numbers = #tpu.dot_dimension_numbers<[1], [0], [0], [1], [0, 0, 1, 1], [], []>} : vector<32x128xf32>, vector<128x128xf32>, vector<32x128xf32> -> vector<32x128xf32>
    %122 = vector.broadcast %114 : vector<1x128xf32> to vector<32x128xf32>
    %123 = arith.addf %121, %122 : vector<32x128xf32>
    %c0_64 = arith.constant 0 : index
    %c0_65 = arith.constant 0 : index
    %124 = vector.load %arg7[%c0_64, %c0_65] : memref<32x128xf32, #tpu.memory_space<vmem>>, vector<32x128xf32>
    tpu.vector_store %arg7[%c0_64, %c0_65], %123 {strides = array<i32>} : memref<32x128xf32, #tpu.memory_space<vmem>>, vector<32x128xf32>,
    return
  }
}

</mosaic_0001>

<llo_original>
// kernel: tpu_custom_call.1
$region0: #{tpu_custom_call.1}
  #allocation0 [shape = 'u32[]', space=smem, size = 0x4, offset = 0x4, fixed_abs, tag = 'smem constant byte address 0x4 - core index']
  #allocation1 [shape = 'u32[72,128]{1,0:T(1,128)}', space=vmem, size = 0x9000, scoped, tag = 'internal scratch']
  %s0 = inlined_call_operand.hbm [shape: f32[16,256], index: 0, kind: input, shape index: {}]
  %s1 = inlined_call_operand.hbm [shape: f32[16,128], index: 1, kind: input, shape index: {}]
  %s2 = inlined_call_operand.hbm [shape: f32[32,256], index: 2, kind: input, shape index: {}]
  %s3 = inlined_call_operand.hbm [shape: f32[256,128], index: 3, kind: input, shape index: {}]
  %s4 = inlined_call_operand.vmem [shape: f32[1,128], index: 4, kind: input, shape index: {}]
  %s5 = inlined_call_operand.hbm [shape: f32[128,128], index: 5, kind: input, shape index: {}]
  %s6 = inlined_call_operand.vmem [shape: f32[1,128], index: 6, kind: input, shape index: {}]
  %s7 = inlined_call_operand.hbm [shape: f32[32,128], index: 7, kind: output, shape index: {0}]
  %s8 = inlined_call_operand.hbm [shape: f32[1,1], index: 8, kind: output, shape index: {1}]
  %9 = xla_tuple %s7, %s8
  %s10 = sld [smem:[#allocation0]]
  $region66: #{tpu_custom_call.1} parent=0
    _
  %s12 = ssub.s32 1, %s10
  %s13 = scalar_select 0, %s12, %s10
  $region1: #{tpu_custom_call.1} parent=0
    #allocation2 [shape = 'u8[16384]{0}', space=vmem, size = 0x4000, scoped, tag = 'input window, operand 0, single buffered']
    #allocation3 [shape = 's32[1]{0}', space=sflag, size = 0x4, scoped, tag = 'scoped memory for tpu_custom_call.1']
    #allocation4 [shape = 's32[1]{0}', space=sflag, size = 0x4, scoped, tag = 'scoped memory for tpu_custom_call.1']
    #allocation5 [shape = 's32[1]{0}', space=sflag, size = 0x4, scoped, tag = 'scoped memory for tpu_custom_call.1']
    #allocation6 [shape = 'u8[8192]{0}', space=vmem, size = 0x2000, scoped, tag = 'input window, operand 1, single buffered']
    #allocation7 [shape = 's32[1]{0}', space=sflag, size = 0x4, scoped, tag = 'scoped memory for tpu_custom_call.1']
    #allocation8 [shape = 'u8[32768]{0}', space=vmem, size = 0x8000, scoped, tag = 'input window, operand 2, single buffered']
    #allocation9 [shape = 'u8[131072]{0}', space=vmem, size = 0x20000, scoped, tag = 'input window, operand 3, single buffered']
    #allocation10 [shape = 's32[1]{0}', space=sflag, size = 0x4, scoped, tag = 'scoped memory for tpu_custom_call.1']
    #allocation11 [shape = 'u8[65536]{0}', space=vmem, size = 0x10000, scoped, tag = 'input window, operand 5, single buffered']
    #allocation12 [shape = 'u8[16384]{0}', space=vmem, size = 0x4000, scoped, tag = 'output window, operand 0, single buffered']
    #allocation13 [shape = 'u8[512]{0}', space=smem, size = 0x200, scoped, tag = 'output window, operand 1, single buffered']
    %14 = vsyncpa [#allocation3], 0
    %15 = vsyncpa [#allocation7], 0
    %16 = vsyncpa [#allocation10], 0
    %17 = vsyncpa [#allocation4], 0
    %18 = vsyncpa [#allocation5], 0
    // Predicated region
    $region2: #{tpu_custom_call.1} parent=1 // pred_check
      _
    $region3: #{tpu_custom_call.1} parent=1 // pred_check_branch
      %20 = sbr.rel (0) target = $region5
    $region4: #{tpu_custom_call.1} parent=1 // pred_region
      %22 = vsyncadd [#allocation3], 0
      %s23 = sshll.u32 %s0, 4
      %s24 = int_to_ptr.hbm [resolvable:$true] %s23
      %s25 = sshll.u32 [#allocation2], 4
      %s26 = int_to_ptr.vmem [resolvable:$true] %s25
      %31 = dma.hbm_to_vmem [thread:$0]  %s24, 512, %s26, [#allocation3], 256, 256, 16
    $region5: #{tpu_custom_call.1} parent=1 // pred_fallthru
      _
    // Predicated region
    $region6: #{tpu_custom_call.1} parent=1 // pred_check
      _
    $region7: #{tpu_custom_call.1} parent=1 // pred_check_branch
      %33 = sbr.rel (0) target = $region9
    $region8: #{tpu_custom_call.1} parent=1 // pred_region
      %35 = vsyncadd [#allocation7], 0
      %s36 = sshll.u32 %s1, 4
      %s37 = int_to_ptr.hbm [resolvable:$true] %s36
      %s38 = sshll.u32 [#allocation6], 4
      %s39 = int_to_ptr.vmem [resolvable:$true] %s38
      %44 = dma.hbm_to_vmem [thread:$0]  %s37, 256, %s39, [#allocation7], 128, 128, 8
    $region9: #{tpu_custom_call.1} parent=1 // pred_fallthru
      _
    // Predicated region
    $region10: #{tpu_custom_call.1} parent=1 // pred_check
      _
    $region11: #{tpu_custom_call.1} parent=1 // pred_check_branch
      %46 = sbr.rel (0) target = $region13
    $region12: #{tpu_custom_call.1} parent=1 // pred_region
      %48 = vsyncadd [#allocation7], 0
      %s49 = sshll.u32 %s2, 4
      %s50 = int_to_ptr.hbm [resolvable:$true] %s49
      %s51 = sshll.u32 [#allocation8], 4
      %s52 = int_to_ptr.vmem [resolvable:$true] %s51
      %57 = dma.hbm_to_vmem [thread:$0]  %s50, 1024, %s52, [#allocation7], 256, 256, 16
    $region13: #{tpu_custom_call.1} parent=1 // pred_fallthru
      _
    // Predicated region
    $region14: #{tpu_custom_call.1} parent=1 // pred_check
      _
    $region15: #{tpu_custom_call.1} parent=1 // pred_check_branch
      %59 = sbr.rel (0) target = $region17
    $region16: #{tpu_custom_call.1} parent=1 // pred_region
      %61 = vsyncadd [#allocation10], 0
      %s62 = sshll.u32 %s3, 4
      %s63 = int_to_ptr.hbm [resolvable:$true] %s62
      %s64 = sshll.u32 [#allocation9], 4
      %s65 = int_to_ptr.vmem [resolvable:$true] %s64
      %70 = dma.hbm_to_vmem [thread:$0]  %s63, 4096, %s65, [#allocation10], 128, 128, 8
    $region17: #{tpu_custom_call.1} parent=1 // pred_fallthru
      _
    // Predicated region
    $region18: #{tpu_custom_call.1} parent=1 // pred_check
      _
    $region19: #{tpu_custom_call.1} parent=1 // pred_check_branch
      %72 = sbr.rel (0) target = $region21
    $region20: #{tpu_custom_call.1} parent=1 // pred_region
      _
    $region21: #{tpu_custom_call.1} parent=1 // pred_fallthru
      _
    // Predicated region
    $region22: #{tpu_custom_call.1} parent=1 // pred_check
      _
    $region23: #{tpu_custom_call.1} parent=1 // pred_check_branch
      %74 = sbr.rel (0) target = $region25
    $region24: #{tpu_custom_call.1} parent=1 // pred_region
      %76 = vsyncadd [#allocation10], 0
      %s77 = sshll.u32 %s5, 4
      %s78 = int_to_ptr.hbm [resolvable:$true] %s77
      %s79 = sshll.u32 [#allocation11], 4
      %s80 = int_to_ptr.vmem [resolvable:$true] %s79
      %85 = dma.hbm_to_vmem [thread:$0]  %s78, 2048, %s80, [#allocation10], 128, 128, 8
    $region25: #{tpu_custom_call.1} parent=1 // pred_fallthru
      _
    // Predicated region
    $region26: #{tpu_custom_call.1} parent=1 // pred_check
      _
    $region27: #{tpu_custom_call.1} parent=1 // pred_check_branch
      %87 = sbr.rel (0) target = $region29
    $region28: #{tpu_custom_call.1} parent=1 // pred_region
      _
    $region29: #{tpu_custom_call.1} parent=1 // pred_fallthru
      _
    // Predicated region
    $region30: #{tpu_custom_call.1} parent=1 // pred_check
      _
    $region31: #{tpu_custom_call.1} parent=1 // pred_check_branch
      %89 = sbr.rel (0) target = $region33
    $region32: #{tpu_custom_call.1} parent=1 // pred_region
      %91 = dma.done [#allocation3], 512
    $region33: #{tpu_custom_call.1} parent=1 // pred_fallthru
      _
    // Predicated region
    $region34: #{tpu_custom_call.1} parent=1 // pred_check
      _
    $region35: #{tpu_custom_call.1} parent=1 // pred_check_branch
      %93 = sbr.rel (0) target = $region37
    $region36: #{tpu_custom_call.1} parent=1 // pred_region
      %95 = dma.done [#allocation7], 256
    $region37: #{tpu_custom_call.1} parent=1 // pred_fallthru
      _
    // Predicated region
    $region38: #{tpu_custom_call.1} parent=1 // pred_check
      _
    $region39: #{tpu_custom_call.1} parent=1 // pred_check_branch
      %97 = sbr.rel (0) target = $region41
    $region40: #{tpu_custom_call.1} parent=1 // pred_region
      %99 = dma.done [#allocation7], 1024
    $region41: #{tpu_custom_call.1} parent=1 // pred_fallthru
      _
    // Predicated region
    $region42: #{tpu_custom_call.1} parent=1 // pred_check
      _
    $region43: #{tpu_custom_call.1} parent=1 // pred_check_branch
      %101 = sbr.rel (0) target = $region45
    $region44: #{tpu_custom_call.1} parent=1 // pred_region
      %103 = dma.done [#allocation10], 4096
    $region45: #{tpu_custom_call.1} parent=1 // pred_fallthru
      _
    // Predicated region
    $region46: #{tpu_custom_call.1} parent=1 // pred_check
      _
    $region47: #{tpu_custom_call.1} parent=1 // pred_check_branch
      %105 = sbr.rel (0) target = $region49
    $region48: #{tpu_custom_call.1} parent=1 // pred_region
      %107 = dma.done [#allocation10], 2048
    $region49: #{tpu_custom_call.1} parent=1 // pred_fallthru
      _
    %v108 = vld [vmem:[#allocation2] sm:$0xff]
    %v109 = vld [vmem:[#allocation2 + $0x8] sm:$0xff]
    %v110 = vld [vmem:[#allocation2 + $0x10] sm:$0xff]
    %v111 = vld [vmem:[#allocation2 + $0x18] sm:$0xff]
    %v112 = vld [vmem:[#allocation6] sm:$0xff]
    %v113 = vld [vmem:[#allocation6 + $0x8] sm:$0xff]
    %v114 = vld [vmem:[#allocation9] sm:$0xff]
    %v115 = vld [vmem:[#allocation9 + $0x8] sm:$0xff]
    %v116 = vld [vmem:[#allocation9 + $0x10] sm:$0xff]
    %v117 = vld [vmem:[#allocation9 + $0x18] sm:$0xff]
    %v118 = vld [vmem:[#allocation9 + $0x20] sm:$0xff]
    %v119 = vld [vmem:[#allocation9 + $0x28] sm:$0xff]
    %v120 = vld [vmem:[#allocation9 + $0x30] sm:$0xff]
    %v121 = vld [vmem:[#allocation9 + $0x38] sm:$0xff]
    %v122 = vld [vmem:[#allocation9 + $0x40] sm:$0xff]
    %v123 = vld [vmem:[#allocation9 + $0x48] sm:$0xff]
    %v124 = vld [vmem:[#allocation9 + $0x50] sm:$0xff]
    %v125 = vld [vmem:[#allocation9 + $0x58] sm:$0xff]
    %v126 = vld [vmem:[#allocation9 + $0x60] sm:$0xff]
    %v127 = vld [vmem:[#allocation9 + $0x68] sm:$0xff]
    %v128 = vld [vmem:[#allocation9 + $0x70] sm:$0xff]
    %v129 = vld [vmem:[#allocation9 + $0x78] sm:$0xff]
    %v130 = vld [vmem:[#allocation9 + $0x80] sm:$0xff]
    %v131 = vld [vmem:[#allocation9 + $0x88] sm:$0xff]
    %v132 = vld [vmem:[#allocation9 + $0x90] sm:$0xff]
    %v133 = vld [vmem:[#allocation9 + $0x98] sm:$0xff]
    %v134 = vld [vmem:[#allocation9 + $0xa0] sm:$0xff]
    %v135 = vld [vmem:[#allocation9 + $0xa8] sm:$0xff]
    %v136 = vld [vmem:[#allocation9 + $0xb0] sm:$0xff]
    %v137 = vld [vmem:[#allocation9 + $0xb8] sm:$0xff]
    %v138 = vld [vmem:[#allocation9 + $0xc0] sm:$0xff]
    %v139 = vld [vmem:[#allocation9 + $0xc8] sm:$0xff]
    %v140 = vld [vmem:[#allocation9 + $0xd0] sm:$0xff]
    %v141 = vld [vmem:[#allocation9 + $0xd8] sm:$0xff]
    %v142 = vld [vmem:[#allocation9 + $0xe0] sm:$0xff]
    %v143 = vld [vmem:[#allocation9 + $0xe8] sm:$0xff]
    %v144 = vld [vmem:[#allocation9 + $0xf0] sm:$0xff]
    %v145 = vld [vmem:[#allocation9 + $0xf8] sm:$0xff]
    %v146 = vld [vmem:[%s4] sm:$0x1]
    %v147 = vld [vmem:[#allocation11] sm:$0xff]
    %v148 = vld [vmem:[#allocation11 + $0x8] sm:$0xff]
    %v149 = vld [vmem:[#allocation11 + $0x10] sm:$0xff]
    %v150 = vld [vmem:[#allocation11 + $0x18] sm:$0xff]
    %v151 = vld [vmem:[#allocation11 + $0x20] sm:$0xff]
    %v152 = vld [vmem:[#allocation11 + $0x28] sm:$0xff]
    %v153 = vld [vmem:[#allocation11 + $0x30] sm:$0xff]
    %v154 = vld [vmem:[#allocation11 + $0x38] sm:$0xff]
    %v155 = vld [vmem:[#allocation11 + $0x40] sm:$0xff]
    %v156 = vld [vmem:[#allocation11 + $0x48] sm:$0xff]
    %v157 = vld [vmem:[#allocation11 + $0x50] sm:$0xff]
    %v158 = vld [vmem:[#allocation11 + $0x58] sm:$0xff]
    %v159 = vld [vmem:[#allocation11 + $0x60] sm:$0xff]
    %v160 = vld [vmem:[#allocation11 + $0x68] sm:$0xff]
    %v161 = vld [vmem:[#allocation11 + $0x70] sm:$0xff]
    %v162 = vld [vmem:[#allocation11 + $0x78] sm:$0xff]
    %v163 = vld [vmem:[%s6] sm:$0x1]
    %v165 = vperm.slane %v146, 0
    %167 = vmatpush.msra.mxu0 %v129
    %168 = vmatpush.msra.mxu0 %v128
    %169 = vmatpush.msra.mxu0 %v127
    %170 = vmatpush.msra.mxu0 %v126
    %171 = vmatpush.msra.mxu0 %v125
    %172 = vmatpush.msra.mxu0 %v124
    %173 = vmatpush.msra.mxu0 %v123
    %174 = vmatpush.msra.mxu0 %v122
    %175 = vmatpush.msra.mxu0 %v121
    %176 = vmatpush.msra.mxu0 %v120
    %177 = vmatpush.msra.mxu0 %v119
    %178 = vmatpush.msra.mxu0 %v118
    %179 = vmatpush.msra.mxu0 %v117
    %180 = vmatpush.msra.mxu0 %v116
    %181 = vmatpush.msra.mxu0 %v115
    %182 = vmatpush.msra.mxu0 %v114
    %183 = vmatmul.f32.gmra.mxu0 %v108
    %v184 = vpop.f32.mrf.mxu0
    %v185 = vadd.f32 %v165, %v184
    %186 = vmatmul.f32.gmra.mxu0 %v110
    %v187 = vpop.f32.mrf.mxu0
    %v188 = vadd.f32 %v165, %v187
    %189 = vdwg.mxu0
    %190 = vmatpush.msra.mxu0 %v145
    %191 = vmatpush.msra.mxu0 %v144
    %192 = vmatpush.msra.mxu0 %v143
    %193 = vmatpush.msra.mxu0 %v142
    %194 = vmatpush.msra.mxu0 %v141
    %195 = vmatpush.msra.mxu0 %v140
    %196 = vmatpush.msra.mxu0 %v139
    %197 = vmatpush.msra.mxu0 %v138
    %198 = vmatpush.msra.mxu0 %v137
    %199 = vmatpush.msra.mxu0 %v136
    %200 = vmatpush.msra.mxu0 %v135
    %201 = vmatpush.msra.mxu0 %v134
    %202 = vmatpush.msra.mxu0 %v133
    %203 = vmatpush.msra.mxu0 %v132
    %204 = vmatpush.msra.mxu0 %v131
    %205 = vmatpush.msra.mxu0 %v130
    %206 = vmatmul.f32.gmra.mxu0 %v109
    %v207 = vpop.f32.mrf.mxu0
    %v208 = vadd.f32 %v185, %v207
    %209 = vmatmul.f32.gmra.mxu0 %v111
    %v210 = vpop.f32.mrf.mxu0
    %v211 = vadd.f32 %v188, %v210
    %212 = vdwg.mxu0
    %v213 = vmax.f32 %v208, 0.0
    %v214 = vmax.f32 %v211, 0.0
    %v216 = vperm.slane %v163, 0
    %218 = vmatpush.msra.mxu0 %v162
    %219 = vmatpush.msra.mxu0 %v161
    %220 = vmatpush.msra.mxu0 %v160
    %221 = vmatpush.msra.mxu0 %v159
    %222 = vmatpush.msra.mxu0 %v158
    %223 = vmatpush.msra.mxu0 %v157
    %224 = vmatpush.msra.mxu0 %v156
    %225 = vmatpush.msra.mxu0 %v155
    %226 = vmatpush.msra.mxu0 %v154
    %227 = vmatpush.msra.mxu0 %v153
    %228 = vmatpush.msra.mxu0 %v152
    %229 = vmatpush.msra.mxu0 %v151
    %230 = vmatpush.msra.mxu0 %v150
    %231 = vmatpush.msra.mxu0 %v149
    %232 = vmatpush.msra.mxu0 %v148
    %233 = vmatpush.msra.mxu0 %v147
    %234 = vmatmul.f32.gmra.mxu0 %v213
    %v235 = vpop.f32.mrf.mxu0
    %v236 = vadd.f32 %v216, %v235
    %237 = vmatmul.f32.gmra.mxu0 %v214
    %v238 = vpop.f32.mrf.mxu0
    %v239 = vadd.f32 %v216, %v238
    %240 = vdwg.mxu0
    %v241 = vsub.f32 %v236, %v112
    %v242 = vsub.f32 %v239, %v113
    %v243 = vmul.f32 %v241, 0.00390625
    %v244 = vmul.f32 %v242, 0.00390625
    %245 = vxpose.xlu0.b32.start [1/16] %v213, 128
    %246 = vxpose.xlu0.b32.cont [2/16] %v214, 128
    %247 = vxpose.xlu0.b32.cont [3/16] 0.0, 128
    %248 = vxpose.xlu0.b32.cont [4/16] 0.0, 128
    %249 = vxpose.xlu0.b32.cont [5/16] 0.0, 128
    %250 = vxpose.xlu0.b32.cont [6/16] 0.0, 128
    %251 = vxpose.xlu0.b32.cont [7/16] 0.0, 128
    %252 = vxpose.xlu0.b32.cont [8/16] 0.0, 128
    %253 = vxpose.xlu0.b32.cont [9/16] 0.0, 128
    %254 = vxpose.xlu0.b32.cont [10/16] 0.0, 128
    %255 = vxpose.xlu0.b32.cont [11/16] 0.0, 128
    %256 = vxpose.xlu0.b32.cont [12/16] 0.0, 128
    %257 = vxpose.xlu0.b32.cont [13/16] 0.0, 128
    %258 = vxpose.xlu0.b32.cont [14/16] 0.0, 128
    %259 = vxpose.xlu0.b32.cont [15/16] 0.0, 128
    %260 = vxpose.xlu0.b32.end [16/16] 0.0, 128
    %v261 = vpop.trf.xlu0
    %v262 = vpop.trf.xlu0
    %v263 = vpop.trf.xlu0
    %v264 = vpop.trf.xlu0
    %v265 = vpop.trf.xlu0
    %v266 = vpop.trf.xlu0
    %v267 = vpop.trf.xlu0
    %v268 = vpop.trf.xlu0
    %v269 = vpop.trf.xlu0
    %v270 = vpop.trf.xlu0
    %v271 = vpop.trf.xlu0
    %v272 = vpop.trf.xlu0
    %v273 = vpop.trf.xlu0
    %v274 = vpop.trf.xlu0
    %v275 = vpop.trf.xlu0
    %v276 = vpop.trf.xlu0
    %vm277 = vcmask 130048
    %v279 = vsel %vm277, %v261, 0
    %v282 = vsel %vm277, %v262, 0
    %v285 = vsel %vm277, %v263, 0
    %v288 = vsel %vm277, %v264, 0
    %v291 = vsel %vm277, %v265, 0
    %v294 = vsel %vm277, %v266, 0
    %v297 = vsel %vm277, %v267, 0
    %v300 = vsel %vm277, %v268, 0
    %v303 = vsel %vm277, %v269, 0
    %v306 = vsel %vm277, %v270, 0
    %v309 = vsel %vm277, %v271, 0
    %v312 = vsel %vm277, %v272, 0
    %v315 = vsel %vm277, %v273, 0
    %v318 = vsel %vm277, %v274, 0
    %v321 = vsel %vm277, %v275, 0
    %v324 = vsel %vm277, %v276, 0
    %326 = vmatpush.msra.mxu0 0.0
    %327 = vmatpush.msra.mxu0 0.0
    %328 = vmatpush.msra.mxu0 0.0
    %329 = vmatpush.msra.mxu0 0.0
    %330 = vmatpush.msra.mxu0 0.0
    %331 = vmatpush.msra.mxu0 0.0
    %332 = vmatpush.msra.mxu0 0.0
    %333 = vmatpush.msra.mxu0 0.0
    %334 = vmatpush.msra.mxu0 0.0
    %335 = vmatpush.msra.mxu0 0.0
    %336 = vmatpush.msra.mxu0 0.0
    %337 = vmatpush.msra.mxu0 0.0
    %338 = vmatpush.msra.mxu0 0.0
    %339 = vmatpush.msra.mxu0 0.0
    %340 = vmatpush.msra.mxu0 %v244
    %341 = vmatpush.msra.mxu0 %v243
    %342 = vmatmul.f32.gmra.mxu0 %v279
    %v343 = vpop.f32.mrf.mxu0
    %v344 = vadd.f32 0.0, %v343
    %345 = vmatmul.f32.gmra.mxu0 %v282
    %v346 = vpop.f32.mrf.mxu0
    %v347 = vadd.f32 0.0, %v346
    %348 = vmatmul.f32.gmra.mxu0 %v285
    %v349 = vpop.f32.mrf.mxu0
    %v350 = vadd.f32 0.0, %v349
    %351 = vmatmul.f32.gmra.mxu0 %v288
    %v352 = vpop.f32.mrf.mxu0
    %v353 = vadd.f32 0.0, %v352
    %354 = vmatmul.f32.gmra.mxu0 %v291
    %v355 = vpop.f32.mrf.mxu0
    %v356 = vadd.f32 0.0, %v355
    %357 = vmatmul.f32.gmra.mxu0 %v294
    %v358 = vpop.f32.mrf.mxu0
    %v359 = vadd.f32 0.0, %v358
    %360 = vmatmul.f32.gmra.mxu0 %v297
    %v361 = vpop.f32.mrf.mxu0
    %v362 = vadd.f32 0.0, %v361
    %363 = vmatmul.f32.gmra.mxu0 %v300
    %v364 = vpop.f32.mrf.mxu0
    %v365 = vadd.f32 0.0, %v364
    %366 = vmatmul.f32.gmra.mxu0 %v303
    %v367 = vpop.f32.mrf.mxu0
    %v368 = vadd.f32 0.0, %v367
    %369 = vmatmul.f32.gmra.mxu0 %v306
    %v370 = vpop.f32.mrf.mxu0
    %v371 = vadd.f32 0.0, %v370
    %372 = vmatmul.f32.gmra.mxu0 %v309
    %v373 = vpop.f32.mrf.mxu0
    %v374 = vadd.f32 0.0, %v373
    %375 = vmatmul.f32.gmra.mxu0 %v312
    %v376 = vpop.f32.mrf.mxu0
    %v377 = vadd.f32 0.0, %v376
    %378 = vmatmul.f32.gmra.mxu0 %v315
    %v379 = vpop.f32.mrf.mxu0
    %v380 = vadd.f32 0.0, %v379
    %381 = vmatmul.f32.gmra.mxu0 %v318
    %v382 = vpop.f32.mrf.mxu0
    %v383 = vadd.f32 0.0, %v382
    %384 = vmatmul.f32.gmra.mxu0 %v321
    %v385 = vpop.f32.mrf.mxu0
    %v386 = vadd.f32 0.0, %v385
    %387 = vmatmul.f32.gmra.mxu0 %v324
    %v388 = vpop.f32.mrf.mxu0
    %v389 = vadd.f32 0.0, %v388
    %390 = vdwg.mxu0
    %v391 = vadd.f32 %v243, %v244
    %v392 = vrot.slane %v391, 4
    %v393 = vadd.f32 %v391, %v392
    %v394 = vrot.slane %v393, 2
    %v395 = vadd.f32 %v393, %v394
    %v396 = vrot.slane %v395, 1
    %v397 = vadd.f32 %v395, %v396
    %398 = vmatpush.xpose.msra.mxu0 %v162
    %399 = vmatpush.xpose.msra.mxu0 %v161
    %400 = vmatpush.xpose.msra.mxu0 %v160
    %401 = vmatpush.xpose.msra.mxu0 %v159
    %402 = vmatpush.xpose.msra.mxu0 %v158
    %403 = vmatpush.xpose.msra.mxu0 %v157
    %404 = vmatpush.xpose.msra.mxu0 %v156
    %405 = vmatpush.xpose.msra.mxu0 %v155
    %406 = vmatpush.xpose.msra.mxu0 %v154
    %407 = vmatpush.xpose.msra.mxu0 %v153
    %408 = vmatpush.xpose.msra.mxu0 %v152
    %409 = vmatpush.xpose.msra.mxu0 %v151
    %410 = vmatpush.xpose.msra.mxu0 %v150
    %411 = vmatpush.xpose.msra.mxu0 %v149
    %412 = vmatpush.xpose.msra.mxu0 %v148
    %413 = vmatpush.xpose.msra.mxu0 %v147
    %414 = vmatmul.f32.gmra.mxu0 %v243
    %v415 = vpop.f32.mrf.mxu0
    %v416 = vadd.f32 0.0, %v415
    %417 = vmatmul.f32.gmra.mxu0 %v244
    %v418 = vpop.f32.mrf.mxu0
    %v419 = vadd.f32 0.0, %v418
    %420 = vdwg.mxu0
    %vm421 = vcmp.gt.f32.partialorder %v208, 0.0
    %vm422 = vcmp.gt.f32.partialorder %v211, 0.0
    %v423 = vsel %vm421, %v416, 0.0
    %v424 = vsel %vm422, %v419, 0.0
    %425 = vxpose.xlu0.b32.start [1/16] %v108, 128
    %426 = vxpose.xlu0.b32.cont [2/16] %v110, 128
    %427 = vxpose.xlu0.b32.cont [3/16] 0.0, 128
    %428 = vxpose.xlu0.b32.cont [4/16] 0.0, 128
    %429 = vxpose.xlu0.b32.cont [5/16] 0.0, 128
    %430 = vxpose.xlu0.b32.cont [6/16] 0.0, 128
    %431 = vxpose.xlu0.b32.cont [7/16] 0.0, 128
    %432 = vxpose.xlu0.b32.cont [8/16] 0.0, 128
    %433 = vxpose.xlu0.b32.cont [9/16] 0.0, 128
    %434 = vxpose.xlu0.b32.cont [10/16] 0.0, 128
    %435 = vxpose.xlu0.b32.cont [11/16] 0.0, 128
    %436 = vxpose.xlu0.b32.cont [12/16] 0.0, 128
    %437 = vxpose.xlu0.b32.cont [13/16] 0.0, 128
    %438 = vxpose.xlu0.b32.cont [14/16] 0.0, 128
    %439 = vxpose.xlu0.b32.cont [15/16] 0.0, 128
    %440 = vxpose.xlu0.b32.end [16/16] 0.0, 128
    %v441 = vpop.trf.xlu0
    %v442 = vpop.trf.xlu0
    %v443 = vpop.trf.xlu0
    %v444 = vpop.trf.xlu0
    %v445 = vpop.trf.xlu0
    %v446 = vpop.trf.xlu0
    %v447 = vpop.trf.xlu0
    %v448 = vpop.trf.xlu0
    %v449 = vpop.trf.xlu0
    %v450 = vpop.trf.xlu0
    %v451 = vpop.trf.xlu0
    %v452 = vpop.trf.xlu0
    %v453 = vpop.trf.xlu0
    %v454 = vpop.trf.xlu0
    %v455 = vpop.trf.xlu0
    %v456 = vpop.trf.xlu0
    %457 = vxpose.xlu0.b32.start [1/16] %v109, 128
    %458 = vxpose.xlu0.b32.cont [2/16] %v111, 128
    %459 = vxpose.xlu0.b32.cont [3/16] 0.0, 128
    %460 = vxpose.xlu0.b32.cont [4/16] 0.0, 128
    %461 = vxpose.xlu0.b32.cont [5/16] 0.0, 128
    %462 = vxpose.xlu0.b32.cont [6/16] 0.0, 128
    %463 = vxpose.xlu0.b32.cont [7/16] 0.0, 128
    %464 = vxpose.xlu0.b32.cont [8/16] 0.0, 128
    %465 = vxpose.xlu0.b32.cont [9/16] 0.0, 128
    %466 = vxpose.xlu0.b32.cont [10/16] 0.0, 128
    %467 = vxpose.xlu0.b32.cont [11/16] 0.0, 128
    %468 = vxpose.xlu0.b32.cont [12/16] 0.0, 128
    %469 = vxpose.xlu0.b32.cont [13/16] 0.0, 128
    %470 = vxpose.xlu0.b32.cont [14/16] 0.0, 128
    %471 = vxpose.xlu0.b32.cont [15/16] 0.0, 128
    %472 = vxpose.xlu0.b32.end [16/16] 0.0, 128
    %v473 = vpop.trf.xlu0
    %v474 = vpop.trf.xlu0
    %v475 = vpop.trf.xlu0
    %v476 = vpop.trf.xlu0
    %v477 = vpop.trf.xlu0
    %v478 = vpop.trf.xlu0
    %v479 = vpop.trf.xlu0
    %v480 = vpop.trf.xlu0
    %v481 = vpop.trf.xlu0
    %v482 = vpop.trf.xlu0
    %v483 = vpop.trf.xlu0
    %v484 = vpop.trf.xlu0
    %v485 = vpop.trf.xlu0
    %v486 = vpop.trf.xlu0
    %v487 = vpop.trf.xlu0
    %v488 = vpop.trf.xlu0
    %v490 = vsel %vm277, %v441, 0
    %v493 = vsel %vm277, %v442, 0
    %v496 = vsel %vm277, %v443, 0
    %v499 = vsel %vm277, %v444, 0
    %v502 = vsel %vm277, %v445, 0
    %v505 = vsel %vm277, %v446, 0
    %v508 = vsel %vm277, %v447, 0
    %v511 = vsel %vm277, %v448, 0
    %v514 = vsel %vm277, %v449, 0
    %v517 = vsel %vm277, %v450, 0
    %v520 = vsel %vm277, %v451, 0
    %v523 = vsel %vm277, %v452, 0
    %v526 = vsel %vm277, %v453, 0
    %v529 = vsel %vm277, %v454, 0
    %v532 = vsel %vm277, %v455, 0
    %v535 = vsel %vm277, %v456, 0
    %v538 = vsel %vm277, %v473, 0
    %v541 = vsel %vm277, %v474, 0
    %v544 = vsel %vm277, %v475, 0
    %v547 = vsel %vm277, %v476, 0
    %v550 = vsel %vm277, %v477, 0
    %v553 = vsel %vm277, %v478, 0
    %v556 = vsel %vm277, %v479, 0
    %v559 = vsel %vm277, %v480, 0
    %v562 = vsel %vm277, %v481, 0
    %v565 = vsel %vm277, %v482, 0
    %v568 = vsel %vm277, %v483, 0
    %v571 = vsel %vm277, %v484, 0
    %v574 = vsel %vm277, %v485, 0
    %v577 = vsel %vm277, %v486, 0
    %v580 = vsel %vm277, %v487, 0
    %v583 = vsel %vm277, %v488, 0
    %585 = vmatpush.msra.mxu0 0.0
    %586 = vmatpush.msra.mxu0 0.0
    %587 = vmatpush.msra.mxu0 0.0
    %588 = vmatpush.msra.mxu0 0.0
    %589 = vmatpush.msra.mxu0 0.0
    %590 = vmatpush.msra.mxu0 0.0
    %591 = vmatpush.msra.mxu0 0.0
    %592 = vmatpush.msra.mxu0 0.0
    %593 = vmatpush.msra.mxu0 0.0
    %594 = vmatpush.msra.mxu0 0.0
    %595 = vmatpush.msra.mxu0 0.0
    %596 = vmatpush.msra.mxu0 0.0
    %597 = vmatpush.msra.mxu0 0.0
    %598 = vmatpush.msra.mxu0 0.0
    %599 = vmatpush.msra.mxu0 %v424
    %600 = vmatpush.msra.mxu0 %v423
    %601 = vmatmul.f32.gmra.mxu0 %v490
    %v602 = vpop.f32.mrf.mxu0
    %v603 = vadd.f32 0.0, %v602
    %604 = vmatmul.f32.gmra.mxu0 %v493
    %v605 = vpop.f32.mrf.mxu0
    %v606 = vadd.f32 0.0, %v605
    %607 = vmatmul.f32.gmra.mxu0 %v496
    %v608 = vpop.f32.mrf.mxu0
    %v609 = vadd.f32 0.0, %v608
    %610 = vmatmul.f32.gmra.mxu0 %v499
    %v611 = vpop.f32.mrf.mxu0
    %v612 = vadd.f32 0.0, %v611
    %613 = vmatmul.f32.gmra.mxu0 %v502
    %v614 = vpop.f32.mrf.mxu0
    %v615 = vadd.f32 0.0, %v614
    %616 = vmatmul.f32.gmra.mxu0 %v505
    %v617 = vpop.f32.mrf.mxu0
    %v618 = vadd.f32 0.0, %v617
    %619 = vmatmul.f32.gmra.mxu0 %v508
    %v620 = vpop.f32.mrf.mxu0
    %v621 = vadd.f32 0.0, %v620
    %622 = vmatmul.f32.gmra.mxu0 %v511
    %v623 = vpop.f32.mrf.mxu0
    %v624 = vadd.f32 0.0, %v623
    %625 = vmatmul.f32.gmra.mxu0 %v514
    %v626 = vpop.f32.mrf.mxu0
    %v627 = vadd.f32 0.0, %v626
    %628 = vmatmul.f32.gmra.mxu0 %v517
    %v629 = vpop.f32.mrf.mxu0
    %v630 = vadd.f32 0.0, %v629
    %631 = vmatmul.f32.gmra.mxu0 %v520
    %v632 = vpop.f32.mrf.mxu0
    %v633 = vadd.f32 0.0, %v632
    %634 = vmatmul.f32.gmra.mxu0 %v523
    %v635 = vpop.f32.mrf.mxu0
    %v636 = vadd.f32 0.0, %v635
    %637 = vmatmul.f32.gmra.mxu0 %v526
    %v638 = vpop.f32.mrf.mxu0
    %v639 = vadd.f32 0.0, %v638
    %640 = vmatmul.f32.gmra.mxu0 %v529
    %v641 = vpop.f32.mrf.mxu0
    %v642 = vadd.f32 0.0, %v641
    %643 = vmatmul.f32.gmra.mxu0 %v532
    %v644 = vpop.f32.mrf.mxu0
    %v645 = vadd.f32 0.0, %v644
    %646 = vmatmul.f32.gmra.mxu0 %v535
    %v647 = vpop.f32.mrf.mxu0
    %v648 = vadd.f32 0.0, %v647
    %649 = vmatmul.f32.gmra.mxu0 %v538
    %v650 = vpop.f32.mrf.mxu0
    %v651 = vadd.f32 0.0, %v650
    %652 = vmatmul.f32.gmra.mxu0 %v541
    %v653 = vpop.f32.mrf.mxu0
    %v654 = vadd.f32 0.0, %v653
    %655 = vmatmul.f32.gmra.mxu0 %v544
    %v656 = vpop.f32.mrf.mxu0
    %v657 = vadd.f32 0.0, %v656
    %658 = vmatmul.f32.gmra.mxu0 %v547
    %v659 = vpop.f32.mrf.mxu0
    %v660 = vadd.f32 0.0, %v659
    %661 = vmatmul.f32.gmra.mxu0 %v550
    %v662 = vpop.f32.mrf.mxu0
    %v663 = vadd.f32 0.0, %v662
    %664 = vmatmul.f32.gmra.mxu0 %v553
    %v665 = vpop.f32.mrf.mxu0
    %v666 = vadd.f32 0.0, %v665
    %667 = vmatmul.f32.gmra.mxu0 %v556
    %v668 = vpop.f32.mrf.mxu0
    %v669 = vadd.f32 0.0, %v668
    %670 = vmatmul.f32.gmra.mxu0 %v559
    %v671 = vpop.f32.mrf.mxu0
    %v672 = vadd.f32 0.0, %v671
    %673 = vmatmul.f32.gmra.mxu0 %v562
    %v674 = vpop.f32.mrf.mxu0
    %v675 = vadd.f32 0.0, %v674
    %676 = vmatmul.f32.gmra.mxu0 %v565
    %v677 = vpop.f32.mrf.mxu0
    %v678 = vadd.f32 0.0, %v677
    %679 = vmatmul.f32.gmra.mxu0 %v568
    %v680 = vpop.f32.mrf.mxu0
    %v681 = vadd.f32 0.0, %v680
    %682 = vmatmul.f32.gmra.mxu0 %v571
    %v683 = vpop.f32.mrf.mxu0
    %v684 = vadd.f32 0.0, %v683
    %685 = vmatmul.f32.gmra.mxu0 %v574
    %v686 = vpop.f32.mrf.mxu0
    %v687 = vadd.f32 0.0, %v686
    %688 = vmatmul.f32.gmra.mxu0 %v577
    %v689 = vpop.f32.mrf.mxu0
    %v690 = vadd.f32 0.0, %v689
    %691 = vmatmul.f32.gmra.mxu0 %v580
    %v692 = vpop.f32.mrf.mxu0
    %v693 = vadd.f32 0.0, %v692
    %694 = vmatmul.f32.gmra.mxu0 %v583
    %v695 = vpop.f32.mrf.mxu0
    %v696 = vadd.f32 0.0, %v695
    %697 = vdwg.mxu0
    %v698 = vadd.f32 %v423, %v424
    %v699 = vrot.slane %v698, 4
    %v700 = vadd.f32 %v698, %v699
    %v701 = vrot.slane %v700, 2
    %v702 = vadd.f32 %v700, %v701
    %v703 = vrot.slane %v702, 1
    %v704 = vadd.f32 %v702, %v703
    %v705 = vmul.f32 %v603, 0.01
    %v706 = vmul.f32 %v606, 0.01
    %v707 = vmul.f32 %v609, 0.01
    %v708 = vmul.f32 %v612, 0.01
    %v709 = vmul.f32 %v615, 0.01
    %v710 = vmul.f32 %v618, 0.01
    %v711 = vmul.f32 %v621, 0.01
    %v712 = vmul.f32 %v624, 0.01
    %v713 = vmul.f32 %v627, 0.01
    %v714 = vmul.f32 %v630, 0.01
    %v715 = vmul.f32 %v633, 0.01
    %v716 = vmul.f32 %v636, 0.01
    %v717 = vmul.f32 %v639, 0.01
    %v718 = vmul.f32 %v642, 0.01
    %v719 = vmul.f32 %v645, 0.01
    %v720 = vmul.f32 %v648, 0.01
    %v721 = vmul.f32 %v651, 0.01
    %v722 = vmul.f32 %v654, 0.01
    %v723 = vmul.f32 %v657, 0.01
    %v724 = vmul.f32 %v660, 0.01
    %v725 = vmul.f32 %v663, 0.01
    %v726 = vmul.f32 %v666, 0.01
    %v727 = vmul.f32 %v669, 0.01
    %v728 = vmul.f32 %v672, 0.01
    %v729 = vmul.f32 %v675, 0.01
    %v730 = vmul.f32 %v678, 0.01
    %v731 = vmul.f32 %v681, 0.01
    %v732 = vmul.f32 %v684, 0.01
    %v733 = vmul.f32 %v687, 0.01
    %v734 = vmul.f32 %v690, 0.01
    %v735 = vmul.f32 %v693, 0.01
    %v736 = vmul.f32 %v696, 0.01
    %v737 = vsub.f32 %v114, %v705
    %v738 = vsub.f32 %v115, %v706
    %v739 = vsub.f32 %v116, %v707
    %v740 = vsub.f32 %v117, %v708
    %v741 = vsub.f32 %v118, %v709
    %v742 = vsub.f32 %v119, %v710
    %v743 = vsub.f32 %v120, %v711
    %v744 = vsub.f32 %v121, %v712
    %v745 = vsub.f32 %v122, %v713
    %v746 = vsub.f32 %v123, %v714
    %v747 = vsub.f32 %v124, %v715
    %v748 = vsub.f32 %v125, %v716
    %v749 = vsub.f32 %v126, %v717
    %v750 = vsub.f32 %v127, %v718
    %v751 = vsub.f32 %v128, %v719
    %v752 = vsub.f32 %v129, %v720
    %v753 = vsub.f32 %v130, %v721
    %v754 = vsub.f32 %v131, %v722
    %v755 = vsub.f32 %v132, %v723
    %v756 = vsub.f32 %v133, %v724
    %v757 = vsub.f32 %v134, %v725
    %v758 = vsub.f32 %v135, %v726
    %v759 = vsub.f32 %v136, %v727
    %v760 = vsub.f32 %v137, %v728
    %v761 = vsub.f32 %v138, %v729
    %v762 = vsub.f32 %v139, %v730
    %v763 = vsub.f32 %v140, %v731
    %v764 = vsub.f32 %v141, %v732
    %v765 = vsub.f32 %v142, %v733
    %v766 = vsub.f32 %v143, %v734
    %v767 = vsub.f32 %v144, %v735
    %v768 = vsub.f32 %v145, %v736
    %v769 = vmul.f32 %v704, 0.01
    %v770 = vsub.f32 %v146, %v769
    %v771 = vmul.f32 %v344, 0.01
    %v772 = vmul.f32 %v347, 0.01
    %v773 = vmul.f32 %v350, 0.01
    %v774 = vmul.f32 %v353, 0.01
    %v775 = vmul.f32 %v356, 0.01
    %v776 = vmul.f32 %v359, 0.01
    %v777 = vmul.f32 %v362, 0.01
    %v778 = vmul.f32 %v365, 0.01
    %v779 = vmul.f32 %v368, 0.01
    %v780 = vmul.f32 %v371, 0.01
    %v781 = vmul.f32 %v374, 0.01
    %v782 = vmul.f32 %v377, 0.01
    %v783 = vmul.f32 %v380, 0.01
    %v784 = vmul.f32 %v383, 0.01
    %v785 = vmul.f32 %v386, 0.01
    %v786 = vmul.f32 %v389, 0.01
    %v787 = vsub.f32 %v147, %v771
    %v788 = vsub.f32 %v148, %v772
    %v789 = vsub.f32 %v149, %v773
    %v790 = vsub.f32 %v150, %v774
    %v791 = vsub.f32 %v151, %v775
    %v792 = vsub.f32 %v152, %v776
    %v793 = vsub.f32 %v153, %v777
    %v794 = vsub.f32 %v154, %v778
    %v795 = vsub.f32 %v155, %v779
    %v796 = vsub.f32 %v156, %v780
    %v797 = vsub.f32 %v157, %v781
    %v798 = vsub.f32 %v158, %v782
    %v799 = vsub.f32 %v159, %v783
    %v800 = vsub.f32 %v160, %v784
    %v801 = vsub.f32 %v161, %v785
    %v802 = vsub.f32 %v162, %v786
    %v803 = vmul.f32 %v397, 0.01
    %v804 = vsub.f32 %v163, %v803
    %v806 = vperm.slane %v770, 0
    %808 = vmatpush.msra.mxu0 %v752
    %809 = vmatpush.msra.mxu0 %v751
    %810 = vmatpush.msra.mxu0 %v750
    %811 = vmatpush.msra.mxu0 %v749
    %812 = vmatpush.msra.mxu0 %v748
    %813 = vmatpush.msra.mxu0 %v747
    %814 = vmatpush.msra.mxu0 %v746
    %815 = vmatpush.msra.mxu0 %v745
    %816 = vmatpush.msra.mxu0 %v744
    %817 = vmatpush.msra.mxu0 %v743
    %818 = vmatpush.msra.mxu0 %v742
    %819 = vmatpush.msra.mxu0 %v741
    %820 = vmatpush.msra.mxu0 %v740
    %821 = vmatpush.msra.mxu0 %v739
    %822 = vmatpush.msra.mxu0 %v738
    %823 = vmatpush.msra.mxu0 %v737
    %824 = vmatmul.f32.gmra.mxu0 %v108
    %v825 = vpop.f32.mrf.mxu0
    %v826 = vadd.f32 %v806, %v825
    %827 = vmatmul.f32.gmra.mxu0 %v110
    %v828 = vpop.f32.mrf.mxu0
    %v829 = vadd.f32 %v806, %v828
    %830 = vdwg.mxu0
    %831 = vmatpush.msra.mxu0 %v768
    %832 = vmatpush.msra.mxu0 %v767
    %833 = vmatpush.msra.mxu0 %v766
    %834 = vmatpush.msra.mxu0 %v765
    %835 = vmatpush.msra.mxu0 %v764
    %836 = vmatpush.msra.mxu0 %v763
    %837 = vmatpush.msra.mxu0 %v762
    %838 = vmatpush.msra.mxu0 %v761
    %839 = vmatpush.msra.mxu0 %v760
    %840 = vmatpush.msra.mxu0 %v759
    %841 = vmatpush.msra.mxu0 %v758
    %842 = vmatpush.msra.mxu0 %v757
    %843 = vmatpush.msra.mxu0 %v756
    %844 = vmatpush.msra.mxu0 %v755
    %845 = vmatpush.msra.mxu0 %v754
    %846 = vmatpush.msra.mxu0 %v753
    %847 = vmatmul.f32.gmra.mxu0 %v109
    %v848 = vpop.f32.mrf.mxu0
    %v849 = vadd.f32 %v826, %v848
    %850 = vmatmul.f32.gmra.mxu0 %v111
    %v851 = vpop.f32.mrf.mxu0
    %v852 = vadd.f32 %v829, %v851
    %853 = vdwg.mxu0
    %v854 = vmax.f32 %v849, 0.0
    %v855 = vmax.f32 %v852, 0.0
    %v857 = vperm.slane %v804, 0
    %859 = vmatpush.msra.mxu0 %v802
    %860 = vmatpush.msra.mxu0 %v801
    %861 = vmatpush.msra.mxu0 %v800
    %862 = vmatpush.msra.mxu0 %v799
    %863 = vmatpush.msra.mxu0 %v798
    %864 = vmatpush.msra.mxu0 %v797
    %865 = vmatpush.msra.mxu0 %v796
    %866 = vmatpush.msra.mxu0 %v795
    %867 = vmatpush.msra.mxu0 %v794
    %868 = vmatpush.msra.mxu0 %v793
    %869 = vmatpush.msra.mxu0 %v792
    %870 = vmatpush.msra.mxu0 %v791
    %871 = vmatpush.msra.mxu0 %v790
    %872 = vmatpush.msra.mxu0 %v789
    %873 = vmatpush.msra.mxu0 %v788
    %874 = vmatpush.msra.mxu0 %v787
    %875 = vmatmul.f32.gmra.mxu0 %v854
    %v876 = vpop.f32.mrf.mxu0
    %v877 = vadd.f32 %v857, %v876
    %878 = vmatmul.f32.gmra.mxu0 %v855
    %v879 = vpop.f32.mrf.mxu0
    %v880 = vadd.f32 %v857, %v879
    %881 = vdwg.mxu0
    %v882 = vsub.f32 %v877, %v112
    %v883 = vsub.f32 %v880, %v113
    %v884 = vmul.f32 %v882, 0.00390625
    %v885 = vmul.f32 %v883, 0.00390625
    %886 = vxpose.xlu0.b32.start [1/16] %v854, 128
    %887 = vxpose.xlu0.b32.cont [2/16] %v855, 128
    %888 = vxpose.xlu0.b32.cont [3/16] 0.0, 128
    %889 = vxpose.xlu0.b32.cont [4/16] 0.0, 128
    %890 = vxpose.xlu0.b32.cont [5/16] 0.0, 128
    %891 = vxpose.xlu0.b32.cont [6/16] 0.0, 128
    %892 = vxpose.xlu0.b32.cont [7/16] 0.0, 128
    %893 = vxpose.xlu0.b32.cont [8/16] 0.0, 128
    %894 = vxpose.xlu0.b32.cont [9/16] 0.0, 128
    %895 = vxpose.xlu0.b32.cont [10/16] 0.0, 128
    %896 = vxpose.xlu0.b32.cont [11/16] 0.0, 128
    %897 = vxpose.xlu0.b32.cont [12/16] 0.0, 128
    %898 = vxpose.xlu0.b32.cont [13/16] 0.0, 128
    %899 = vxpose.xlu0.b32.cont [14/16] 0.0, 128
    %900 = vxpose.xlu0.b32.cont [15/16] 0.0, 128
    %901 = vxpose.xlu0.b32.end [16/16] 0.0, 128
    %v902 = vpop.trf.xlu0
    %v903 = vpop.trf.xlu0
    %v904 = vpop.trf.xlu0
    %v905 = vpop.trf.xlu0
    %v906 = vpop.trf.xlu0
    %v907 = vpop.trf.xlu0
    %v908 = vpop.trf.xlu0
    %v909 = vpop.trf.xlu0
    %v910 = vpop.trf.xlu0
    %v911 = vpop.trf.xlu0
    %v912 = vpop.trf.xlu0
    %v913 = vpop.trf.xlu0
    %v914 = vpop.trf.xlu0
    %v915 = vpop.trf.xlu0
    %v916 = vpop.trf.xlu0
    %v917 = vpop.trf.xlu0
    %v919 = vsel %vm277, %v902, 0
    %v922 = vsel %vm277, %v903, 0
    %v925 = vsel %vm277, %v904, 0
    %v928 = vsel %vm277, %v905, 0
    %v931 = vsel %vm277, %v906, 0
    %v934 = vsel %vm277, %v907, 0
    %v937 = vsel %vm277, %v908, 0
    %v940 = vsel %vm277, %v909, 0
    %v943 = vsel %vm277, %v910, 0
    %v946 = vsel %vm277, %v911, 0
    %v949 = vsel %vm277, %v912, 0
    %v952 = vsel %vm277, %v913, 0
    %v955 = vsel %vm277, %v914, 0
    %v958 = vsel %vm277, %v915, 0
    %v961 = vsel %vm277, %v916, 0
    %v964 = vsel %vm277, %v917, 0
    %966 = vmatpush.msra.mxu0 0.0
    %967 = vmatpush.msra.mxu0 0.0
    %968 = vmatpush.msra.mxu0 0.0
    %969 = vmatpush.msra.mxu0 0.0
    %970 = vmatpush.msra.mxu0 0.0
    %971 = vmatpush.msra.mxu0 0.0
    %972 = vmatpush.msra.mxu0 0.0
    %973 = vmatpush.msra.mxu0 0.0
    %974 = vmatpush.msra.mxu0 0.0
    %975 = vmatpush.msra.mxu0 0.0
    %976 = vmatpush.msra.mxu0 0.0
    %977 = vmatpush.msra.mxu0 0.0
    %978 = vmatpush.msra.mxu0 0.0
    %979 = vmatpush.msra.mxu0 0.0
    %980 = vmatpush.msra.mxu0 %v885
    %981 = vmatpush.msra.mxu0 %v884
    %982 = vmatmul.f32.gmra.mxu0 %v919
    %v983 = vpop.f32.mrf.mxu0
    %v984 = vadd.f32 0.0, %v983
    %985 = vmatmul.f32.gmra.mxu0 %v922
    %v986 = vpop.f32.mrf.mxu0
    %v987 = vadd.f32 0.0, %v986
    %988 = vmatmul.f32.gmra.mxu0 %v925
    %v989 = vpop.f32.mrf.mxu0
    %v990 = vadd.f32 0.0, %v989
    %991 = vmatmul.f32.gmra.mxu0 %v928
    %v992 = vpop.f32.mrf.mxu0
    %v993 = vadd.f32 0.0, %v992
    %994 = vmatmul.f32.gmra.mxu0 %v931
    %v995 = vpop.f32.mrf.mxu0
    %v996 = vadd.f32 0.0, %v995
    %997 = vmatmul.f32.gmra.mxu0 %v934
    %v998 = vpop.f32.mrf.mxu0
    %v999 = vadd.f32 0.0, %v998
    %1000 = vmatmul.f32.gmra.mxu0 %v937
    %v1001 = vpop.f32.mrf.mxu0
    %v1002 = vadd.f32 0.0, %v1001
    %1003 = vmatmul.f32.gmra.mxu0 %v940
    %v1004 = vpop.f32.mrf.mxu0
    %v1005 = vadd.f32 0.0, %v1004
    %1006 = vmatmul.f32.gmra.mxu0 %v943
    %v1007 = vpop.f32.mrf.mxu0
    %v1008 = vadd.f32 0.0, %v1007
    %1009 = vmatmul.f32.gmra.mxu0 %v946
    %v1010 = vpop.f32.mrf.mxu0
    %v1011 = vadd.f32 0.0, %v1010
    %1012 = vmatmul.f32.gmra.mxu0 %v949
    %v1013 = vpop.f32.mrf.mxu0
    %v1014 = vadd.f32 0.0, %v1013
    %1015 = vmatmul.f32.gmra.mxu0 %v952
    %v1016 = vpop.f32.mrf.mxu0
    %v1017 = vadd.f32 0.0, %v1016
    %1018 = vmatmul.f32.gmra.mxu0 %v955
    %v1019 = vpop.f32.mrf.mxu0
    %v1020 = vadd.f32 0.0, %v1019
    %1021 = vmatmul.f32.gmra.mxu0 %v958
    %v1022 = vpop.f32.mrf.mxu0
    %v1023 = vadd.f32 0.0, %v1022
    %1024 = vmatmul.f32.gmra.mxu0 %v961
    %v1025 = vpop.f32.mrf.mxu0
    %v1026 = vadd.f32 0.0, %v1025
    %1027 = vmatmul.f32.gmra.mxu0 %v964
    %v1028 = vpop.f32.mrf.mxu0
    %v1029 = vadd.f32 0.0, %v1028
    %1030 = vdwg.mxu0
    %v1031 = vadd.f32 %v884, %v885
    %v1032 = vrot.slane %v1031, 4
    %v1033 = vadd.f32 %v1031, %v1032
    %v1034 = vrot.slane %v1033, 2
    %v1035 = vadd.f32 %v1033, %v1034
    %v1036 = vrot.slane %v1035, 1
    %v1037 = vadd.f32 %v1035, %v1036
    %1038 = vmatpush.xpose.msra.mxu0 %v802
    %1039 = vmatpush.xpose.msra.mxu0 %v801
    %1040 = vmatpush.xpose.msra.mxu0 %v800
    %1041 = vmatpush.xpose.msra.mxu0 %v799
    %1042 = vmatpush.xpose.msra.mxu0 %v798
    %1043 = vmatpush.xpose.msra.mxu0 %v797
    %1044 = vmatpush.xpose.msra.mxu0 %v796
    %1045 = vmatpush.xpose.msra.mxu0 %v795
    %1046 = vmatpush.xpose.msra.mxu0 %v794
    %1047 = vmatpush.xpose.msra.mxu0 %v793
    %1048 = vmatpush.xpose.msra.mxu0 %v792
    %1049 = vmatpush.xpose.msra.mxu0 %v791
    %1050 = vmatpush.xpose.msra.mxu0 %v790
    %1051 = vmatpush.xpose.msra.mxu0 %v789
    %1052 = vmatpush.xpose.msra.mxu0 %v788
    %1053 = vmatpush.xpose.msra.mxu0 %v787
    %1054 = vmatmul.f32.gmra.mxu0 %v884
    %v1055 = vpop.f32.mrf.mxu0
    %v1056 = vadd.f32 0.0, %v1055
    %1057 = vmatmul.f32.gmra.mxu0 %v885
    %v1058 = vpop.f32.mrf.mxu0
    %v1059 = vadd.f32 0.0, %v1058
    %1060 = vdwg.mxu0
    %vm1061 = vcmp.gt.f32.partialorder %v849, 0.0
    %vm1062 = vcmp.gt.f32.partialorder %v852, 0.0
    %v1063 = vsel %vm1061, %v1056, 0.0
    %v1064 = vsel %vm1062, %v1059, 0.0
    %1065 = vmatpush.msra.mxu0 0.0
    %1066 = vmatpush.msra.mxu0 0.0
    %1067 = vmatpush.msra.mxu0 0.0
    %1068 = vmatpush.msra.mxu0 0.0
    %1069 = vmatpush.msra.mxu0 0.0
    %1070 = vmatpush.msra.mxu0 0.0
    %1071 = vmatpush.msra.mxu0 0.0
    %1072 = vmatpush.msra.mxu0 0.0
    %1073 = vmatpush.msra.mxu0 0.0
    %1074 = vmatpush.msra.mxu0 0.0
    %1075 = vmatpush.msra.mxu0 0.0
    %1076 = vmatpush.msra.mxu0 0.0
    %1077 = vmatpush.msra.mxu0 0.0
    %1078 = vmatpush.msra.mxu0 0.0
    %1079 = vmatpush.msra.mxu0 %v1064
    %1080 = vmatpush.msra.mxu0 %v1063
    %1081 = vmatmul.f32.gmra.mxu0 %v490
    %v1082 = vpop.f32.mrf.mxu0
    %v1083 = vadd.f32 0.0, %v1082
    %1084 = vmatmul.f32.gmra.mxu0 %v493
    %v1085 = vpop.f32.mrf.mxu0
    %v1086 = vadd.f32 0.0, %v1085
    %1087 = vmatmul.f32.gmra.mxu0 %v496
    %v1088 = vpop.f32.mrf.mxu0
    %v1089 = vadd.f32 0.0, %v1088
    %1090 = vmatmul.f32.gmra.mxu0 %v499
    %v1091 = vpop.f32.mrf.mxu0
    %v1092 = vadd.f32 0.0, %v1091
    %1093 = vmatmul.f32.gmra.mxu0 %v502
    %v1094 = vpop.f32.mrf.mxu0
    %v1095 = vadd.f32 0.0, %v1094
    %1096 = vmatmul.f32.gmra.mxu0 %v505
    %v1097 = vpop.f32.mrf.mxu0
    %v1098 = vadd.f32 0.0, %v1097
    %1099 = vmatmul.f32.gmra.mxu0 %v508
    %v1100 = vpop.f32.mrf.mxu0
    %v1101 = vadd.f32 0.0, %v1100
    %1102 = vmatmul.f32.gmra.mxu0 %v511
    %v1103 = vpop.f32.mrf.mxu0
    %v1104 = vadd.f32 0.0, %v1103
    %1105 = vmatmul.f32.gmra.mxu0 %v514
    %v1106 = vpop.f32.mrf.mxu0
    %v1107 = vadd.f32 0.0, %v1106
    %1108 = vmatmul.f32.gmra.mxu0 %v517
    %v1109 = vpop.f32.mrf.mxu0
    %v1110 = vadd.f32 0.0, %v1109
    %1111 = vmatmul.f32.gmra.mxu0 %v520
    %v1112 = vpop.f32.mrf.mxu0
    %v1113 = vadd.f32 0.0, %v1112
    %1114 = vmatmul.f32.gmra.mxu0 %v523
    %v1115 = vpop.f32.mrf.mxu0
    %v1116 = vadd.f32 0.0, %v1115
    %1117 = vmatmul.f32.gmra.mxu0 %v526
    %v1118 = vpop.f32.mrf.mxu0
    %v1119 = vadd.f32 0.0, %v1118
    %1120 = vmatmul.f32.gmra.mxu0 %v529
    %v1121 = vpop.f32.mrf.mxu0
    %v1122 = vadd.f32 0.0, %v1121
    %1123 = vmatmul.f32.gmra.mxu0 %v532
    %v1124 = vpop.f32.mrf.mxu0
    %v1125 = vadd.f32 0.0, %v1124
    %1126 = vmatmul.f32.gmra.mxu0 %v535
    %v1127 = vpop.f32.mrf.mxu0
    %v1128 = vadd.f32 0.0, %v1127
    %1129 = vmatmul.f32.gmra.mxu0 %v538
    %v1130 = vpop.f32.mrf.mxu0
    %v1131 = vadd.f32 0.0, %v1130
    %1132 = vmatmul.f32.gmra.mxu0 %v541
    %v1133 = vpop.f32.mrf.mxu0
    %v1134 = vadd.f32 0.0, %v1133
    %1135 = vmatmul.f32.gmra.mxu0 %v544
    %v1136 = vpop.f32.mrf.mxu0
    %v1137 = vadd.f32 0.0, %v1136
    %1138 = vmatmul.f32.gmra.mxu0 %v547
    %v1139 = vpop.f32.mrf.mxu0
    %v1140 = vadd.f32 0.0, %v1139
    %1141 = vmatmul.f32.gmra.mxu0 %v550
    %v1142 = vpop.f32.mrf.mxu0
    %v1143 = vadd.f32 0.0, %v1142
    %1144 = vmatmul.f32.gmra.mxu0 %v553
    %v1145 = vpop.f32.mrf.mxu0
    %v1146 = vadd.f32 0.0, %v1145
    %1147 = vmatmul.f32.gmra.mxu0 %v556
    %v1148 = vpop.f32.mrf.mxu0
    %v1149 = vadd.f32 0.0, %v1148
    %1150 = vmatmul.f32.gmra.mxu0 %v559
    %v1151 = vpop.f32.mrf.mxu0
    %v1152 = vadd.f32 0.0, %v1151
    %1153 = vmatmul.f32.gmra.mxu0 %v562
    %v1154 = vpop.f32.mrf.mxu0
    %v1155 = vadd.f32 0.0, %v1154
    %1156 = vmatmul.f32.gmra.mxu0 %v565
    %v1157 = vpop.f32.mrf.mxu0
    %v1158 = vadd.f32 0.0, %v1157
    %1159 = vmatmul.f32.gmra.mxu0 %v568
    %v1160 = vpop.f32.mrf.mxu0
    %v1161 = vadd.f32 0.0, %v1160
    %1162 = vmatmul.f32.gmra.mxu0 %v571
    %v1163 = vpop.f32.mrf.mxu0
    %v1164 = vadd.f32 0.0, %v1163
    %1165 = vmatmul.f32.gmra.mxu0 %v574
    %v1166 = vpop.f32.mrf.mxu0
    %v1167 = vadd.f32 0.0, %v1166
    %1168 = vmatmul.f32.gmra.mxu0 %v577
    %v1169 = vpop.f32.mrf.mxu0
    %v1170 = vadd.f32 0.0, %v1169
    %1171 = vmatmul.f32.gmra.mxu0 %v580
    %v1172 = vpop.f32.mrf.mxu0
    %v1173 = vadd.f32 0.0, %v1172
    %1174 = vmatmul.f32.gmra.mxu0 %v583
    %v1175 = vpop.f32.mrf.mxu0
    %v1176 = vadd.f32 0.0, %v1175
    %1177 = vdwg.mxu0
    %v1178 = vadd.f32 %v1063, %v1064
    %v1179 = vrot.slane %v1178, 4
    %v1180 = vadd.f32 %v1178, %v1179
    %v1181 = vrot.slane %v1180, 2
    %v1182 = vadd.f32 %v1180, %v1181
    %v1183 = vrot.slane %v1182, 1
    %v1184 = vadd.f32 %v1182, %v1183
    %v1185 = vmul.f32 %v1083, 0.01
    %v1186 = vmul.f32 %v1086, 0.01
    %v1187 = vmul.f32 %v1089, 0.01
    %v1188 = vmul.f32 %v1092, 0.01
    %v1189 = vmul.f32 %v1095, 0.01
    %v1190 = vmul.f32 %v1098, 0.01
    %v1191 = vmul.f32 %v1101, 0.01
    %v1192 = vmul.f32 %v1104, 0.01
    %v1193 = vmul.f32 %v1107, 0.01
    %v1194 = vmul.f32 %v1110, 0.01
    %v1195 = vmul.f32 %v1113, 0.01
    %v1196 = vmul.f32 %v1116, 0.01
    %v1197 = vmul.f32 %v1119, 0.01
    %v1198 = vmul.f32 %v1122, 0.01
    %v1199 = vmul.f32 %v1125, 0.01
    %v1200 = vmul.f32 %v1128, 0.01
    %v1201 = vmul.f32 %v1131, 0.01
    %v1202 = vmul.f32 %v1134, 0.01
    %v1203 = vmul.f32 %v1137, 0.01
    %v1204 = vmul.f32 %v1140, 0.01
    %v1205 = vmul.f32 %v1143, 0.01
    %v1206 = vmul.f32 %v1146, 0.01
    %v1207 = vmul.f32 %v1149, 0.01
    %v1208 = vmul.f32 %v1152, 0.01
    %v1209 = vmul.f32 %v1155, 0.01
    %v1210 = vmul.f32 %v1158, 0.01
    %v1211 = vmul.f32 %v1161, 0.01
    %v1212 = vmul.f32 %v1164, 0.01
    %v1213 = vmul.f32 %v1167, 0.01
    %v1214 = vmul.f32 %v1170, 0.01
    %v1215 = vmul.f32 %v1173, 0.01
    %v1216 = vmul.f32 %v1176, 0.01
    %v1217 = vsub.f32 %v737, %v1185
    %v1218 = vsub.f32 %v738, %v1186
    %v1219 = vsub.f32 %v739, %v1187
    %v1220 = vsub.f32 %v740, %v1188
    %v1221 = vsub.f32 %v741, %v1189
    %v1222 = vsub.f32 %v742, %v1190
    %v1223 = vsub.f32 %v743, %v1191
    %v1224 = vsub.f32 %v744, %v1192
    %v1225 = vsub.f32 %v745, %v1193
    %v1226 = vsub.f32 %v746, %v1194
    %v1227 = vsub.f32 %v747, %v1195
    %v1228 = vsub.f32 %v748, %v1196
    %v1229 = vsub.f32 %v749, %v1197
    %v1230 = vsub.f32 %v750, %v1198
    %v1231 = vsub.f32 %v751, %v1199
    %v1232 = vsub.f32 %v752, %v1200
    %v1233 = vsub.f32 %v753, %v1201
    %v1234 = vsub.f32 %v754, %v1202
    %v1235 = vsub.f32 %v755, %v1203
    %v1236 = vsub.f32 %v756, %v1204
    %v1237 = vsub.f32 %v757, %v1205
    %v1238 = vsub.f32 %v758, %v1206
    %v1239 = vsub.f32 %v759, %v1207
    %v1240 = vsub.f32 %v760, %v1208
    %v1241 = vsub.f32 %v761, %v1209
    %v1242 = vsub.f32 %v762, %v1210
    %v1243 = vsub.f32 %v763, %v1211
    %v1244 = vsub.f32 %v764, %v1212
    %v1245 = vsub.f32 %v765, %v1213
    %v1246 = vsub.f32 %v766, %v1214
    %v1247 = vsub.f32 %v767, %v1215
    %v1248 = vsub.f32 %v768, %v1216
    %v1249 = vmul.f32 %v1184, 0.01
    %v1250 = vsub.f32 %v770, %v1249
    %v1251 = vmul.f32 %v984, 0.01
    %v1252 = vmul.f32 %v987, 0.01
    %v1253 = vmul.f32 %v990, 0.01
    %v1254 = vmul.f32 %v993, 0.01
    %v1255 = vmul.f32 %v996, 0.01
    %v1256 = vmul.f32 %v999, 0.01
    %v1257 = vmul.f32 %v1002, 0.01
    %v1258 = vmul.f32 %v1005, 0.01
    %v1259 = vmul.f32 %v1008, 0.01
    %v1260 = vmul.f32 %v1011, 0.01
    %v1261 = vmul.f32 %v1014, 0.01
    %v1262 = vmul.f32 %v1017, 0.01
    %v1263 = vmul.f32 %v1020, 0.01
    %v1264 = vmul.f32 %v1023, 0.01
    %v1265 = vmul.f32 %v1026, 0.01
    %v1266 = vmul.f32 %v1029, 0.01
    %v1267 = vsub.f32 %v787, %v1251
    %v1268 = vsub.f32 %v788, %v1252
    %v1269 = vsub.f32 %v789, %v1253
    %v1270 = vsub.f32 %v790, %v1254
    %v1271 = vsub.f32 %v791, %v1255
    %v1272 = vsub.f32 %v792, %v1256
    %v1273 = vsub.f32 %v793, %v1257
    %v1274 = vsub.f32 %v794, %v1258
    %v1275 = vsub.f32 %v795, %v1259
    %v1276 = vsub.f32 %v796, %v1260
    %v1277 = vsub.f32 %v797, %v1261
    %v1278 = vsub.f32 %v798, %v1262
    %v1279 = vsub.f32 %v799, %v1263
    %v1280 = vsub.f32 %v800, %v1264
    %v1281 = vsub.f32 %v801, %v1265
    %v1282 = vsub.f32 %v802, %v1266
    %v1283 = vmul.f32 %v1037, 0.01
    %v1284 = vsub.f32 %v804, %v1283
    %v1286 = vperm.slane %v1250, 0
    %1288 = vmatpush.msra.mxu0 %v1232
    %1289 = vmatpush.msra.mxu0 %v1231
    %1290 = vmatpush.msra.mxu0 %v1230
    %1291 = vmatpush.msra.mxu0 %v1229
    %1292 = vmatpush.msra.mxu0 %v1228
    %1293 = vmatpush.msra.mxu0 %v1227
    %1294 = vmatpush.msra.mxu0 %v1226
    %1295 = vmatpush.msra.mxu0 %v1225
    %1296 = vmatpush.msra.mxu0 %v1224
    %1297 = vmatpush.msra.mxu0 %v1223
    %1298 = vmatpush.msra.mxu0 %v1222
    %1299 = vmatpush.msra.mxu0 %v1221
    %1300 = vmatpush.msra.mxu0 %v1220
    %1301 = vmatpush.msra.mxu0 %v1219
    %1302 = vmatpush.msra.mxu0 %v1218
    %1303 = vmatpush.msra.mxu0 %v1217
    %1304 = vmatmul.f32.gmra.mxu0 %v108
    %v1305 = vpop.f32.mrf.mxu0
    %v1306 = vadd.f32 %v1286, %v1305
    %1307 = vmatmul.f32.gmra.mxu0 %v110
    %v1308 = vpop.f32.mrf.mxu0
    %v1309 = vadd.f32 %v1286, %v1308
    %1310 = vdwg.mxu0
    %1311 = vmatpush.msra.mxu0 %v1248
    %1312 = vmatpush.msra.mxu0 %v1247
    %1313 = vmatpush.msra.mxu0 %v1246
    %1314 = vmatpush.msra.mxu0 %v1245
    %1315 = vmatpush.msra.mxu0 %v1244
    %1316 = vmatpush.msra.mxu0 %v1243
    %1317 = vmatpush.msra.mxu0 %v1242
    %1318 = vmatpush.msra.mxu0 %v1241
    %1319 = vmatpush.msra.mxu0 %v1240
    %1320 = vmatpush.msra.mxu0 %v1239
    %1321 = vmatpush.msra.mxu0 %v1238
    %1322 = vmatpush.msra.mxu0 %v1237
    %1323 = vmatpush.msra.mxu0 %v1236
    %1324 = vmatpush.msra.mxu0 %v1235
    %1325 = vmatpush.msra.mxu0 %v1234
    %1326 = vmatpush.msra.mxu0 %v1233
    %1327 = vmatmul.f32.gmra.mxu0 %v109
    %v1328 = vpop.f32.mrf.mxu0
    %v1329 = vadd.f32 %v1306, %v1328
    %1330 = vmatmul.f32.gmra.mxu0 %v111
    %v1331 = vpop.f32.mrf.mxu0
    %v1332 = vadd.f32 %v1309, %v1331
    %1333 = vdwg.mxu0
    %v1334 = vmax.f32 %v1329, 0.0
    %v1335 = vmax.f32 %v1332, 0.0
    %v1337 = vperm.slane %v1284, 0
    %1339 = vmatpush.msra.mxu0 %v1282
    %1340 = vmatpush.msra.mxu0 %v1281
    %1341 = vmatpush.msra.mxu0 %v1280
    %1342 = vmatpush.msra.mxu0 %v1279
    %1343 = vmatpush.msra.mxu0 %v1278
    %1344 = vmatpush.msra.mxu0 %v1277
    %1345 = vmatpush.msra.mxu0 %v1276
    %1346 = vmatpush.msra.mxu0 %v1275
    %1347 = vmatpush.msra.mxu0 %v1274
    %1348 = vmatpush.msra.mxu0 %v1273
    %1349 = vmatpush.msra.mxu0 %v1272
    %1350 = vmatpush.msra.mxu0 %v1271
    %1351 = vmatpush.msra.mxu0 %v1270
    %1352 = vmatpush.msra.mxu0 %v1269
    %1353 = vmatpush.msra.mxu0 %v1268
    %1354 = vmatpush.msra.mxu0 %v1267
    %1355 = vmatmul.f32.gmra.mxu0 %v1334
    %v1356 = vpop.f32.mrf.mxu0
    %v1357 = vadd.f32 %v1337, %v1356
    %1358 = vmatmul.f32.gmra.mxu0 %v1335
    %v1359 = vpop.f32.mrf.mxu0
    %v1360 = vadd.f32 %v1337, %v1359
    %1361 = vdwg.mxu0
    %v1362 = vsub.f32 %v1357, %v112
    %v1363 = vsub.f32 %v1360, %v113
    %v1364 = vmul.f32 %v1362, %v1362
    %v1365 = vmul.f32 %v1363, %v1363
    %v1366 = vadd.f32 %v1364, %v1365
    %1367 = vadd.xlane.f32.xlu0 %v1366
    %v1368 = vpop.xlane.xlu0 %1367
    %v1369 = vrot.slane %v1368, 4
    %v1370 = vadd.f32 %v1368, %v1369
    %v1371 = vrot.slane %v1370, 2
    %v1372 = vadd.f32 %v1370, %v1371
    %v1373 = vrot.slane %v1372, 1
    %v1374 = vadd.f32 %v1372, %v1373
    %s1375 = vtos %v1374
    %s1376 = smul.f32 %s1375, 0.001953125
    %s1377 = scalar_lea.smem [#allocation13], 0
    %1378 = sst [smem:[%s1377]] %s1376
    %v1379 = vmul.f32 %v1362, 0.00390625
    %v1380 = vmul.f32 %v1363, 0.00390625
    %1381 = vxpose.xlu0.b32.start [1/16] %v1334, 128
    %1382 = vxpose.xlu0.b32.cont [2/16] %v1335, 128
    %1383 = vxpose.xlu0.b32.cont [3/16] 0.0, 128
    %1384 = vxpose.xlu0.b32.cont [4/16] 0.0, 128
    %1385 = vxpose.xlu0.b32.cont [5/16] 0.0, 128
    %1386 = vxpose.xlu0.b32.cont [6/16] 0.0, 128
    %1387 = vxpose.xlu0.b32.cont [7/16] 0.0, 128
    %1388 = vxpose.xlu0.b32.cont [8/16] 0.0, 128
    %1389 = vxpose.xlu0.b32.cont [9/16] 0.0, 128
    %1390 = vxpose.xlu0.b32.cont [10/16] 0.0, 128
    %1391 = vxpose.xlu0.b32.cont [11/16] 0.0, 128
    %1392 = vxpose.xlu0.b32.cont [12/16] 0.0, 128
    %1393 = vxpose.xlu0.b32.cont [13/16] 0.0, 128
    %1394 = vxpose.xlu0.b32.cont [14/16] 0.0, 128
    %1395 = vxpose.xlu0.b32.cont [15/16] 0.0, 128
    %1396 = vxpose.xlu0.b32.end [16/16] 0.0, 128
    %v1397 = vpop.trf.xlu0
    %v1398 = vpop.trf.xlu0
    %v1399 = vpop.trf.xlu0
    %v1400 = vpop.trf.xlu0
    %v1401 = vpop.trf.xlu0
    %v1402 = vpop.trf.xlu0
    %v1403 = vpop.trf.xlu0
    %v1404 = vpop.trf.xlu0
    %v1405 = vpop.trf.xlu0
    %v1406 = vpop.trf.xlu0
    %v1407 = vpop.trf.xlu0
    %v1408 = vpop.trf.xlu0
    %v1409 = vpop.trf.xlu0
    %v1410 = vpop.trf.xlu0
    %v1411 = vpop.trf.xlu0
    %v1412 = vpop.trf.xlu0
    %v1414 = vsel %vm277, %v1397, 0
    %v1417 = vsel %vm277, %v1398, 0
    %v1420 = vsel %vm277, %v1399, 0
    %v1423 = vsel %vm277, %v1400, 0
    %v1426 = vsel %vm277, %v1401, 0
    %v1429 = vsel %vm277, %v1402, 0
    %v1432 = vsel %vm277, %v1403, 0
    %v1435 = vsel %vm277, %v1404, 0
    %v1438 = vsel %vm277, %v1405, 0
    %v1441 = vsel %vm277, %v1406, 0
    %v1444 = vsel %vm277, %v1407, 0
    %v1447 = vsel %vm277, %v1408, 0
    %v1450 = vsel %vm277, %v1409, 0
    %v1453 = vsel %vm277, %v1410, 0
    %v1456 = vsel %vm277, %v1411, 0
    %v1459 = vsel %vm277, %v1412, 0
    %1461 = vmatpush.msra.mxu0 0.0
    %1462 = vmatpush.msra.mxu0 0.0
    %1463 = vmatpush.msra.mxu0 0.0
    %1464 = vmatpush.msra.mxu0 0.0
    %1465 = vmatpush.msra.mxu0 0.0
    %1466 = vmatpush.msra.mxu0 0.0
    %1467 = vmatpush.msra.mxu0 0.0
    %1468 = vmatpush.msra.mxu0 0.0
    %1469 = vmatpush.msra.mxu0 0.0
    %1470 = vmatpush.msra.mxu0 0.0
    %1471 = vmatpush.msra.mxu0 0.0
    %1472 = vmatpush.msra.mxu0 0.0
    %1473 = vmatpush.msra.mxu0 0.0
    %1474 = vmatpush.msra.mxu0 0.0
    %1475 = vmatpush.msra.mxu0 %v1380
    %1476 = vmatpush.msra.mxu0 %v1379
    %1477 = vmatmul.f32.gmra.mxu0 %v1414
    %v1478 = vpop.f32.mrf.mxu0
    %v1479 = vadd.f32 0.0, %v1478
    %1480 = vmatmul.f32.gmra.mxu0 %v1417
    %v1481 = vpop.f32.mrf.mxu0
    %v1482 = vadd.f32 0.0, %v1481
    %1483 = vmatmul.f32.gmra.mxu0 %v1420
    %v1484 = vpop.f32.mrf.mxu0
    %v1485 = vadd.f32 0.0, %v1484
    %1486 = vmatmul.f32.gmra.mxu0 %v1423
    %v1487 = vpop.f32.mrf.mxu0
    %v1488 = vadd.f32 0.0, %v1487
    %1489 = vmatmul.f32.gmra.mxu0 %v1426
    %v1490 = vpop.f32.mrf.mxu0
    %v1491 = vadd.f32 0.0, %v1490
    %1492 = vmatmul.f32.gmra.mxu0 %v1429
    %v1493 = vpop.f32.mrf.mxu0
    %v1494 = vadd.f32 0.0, %v1493
    %1495 = vmatmul.f32.gmra.mxu0 %v1432
    %v1496 = vpop.f32.mrf.mxu0
    %v1497 = vadd.f32 0.0, %v1496
    %1498 = vmatmul.f32.gmra.mxu0 %v1435
    %v1499 = vpop.f32.mrf.mxu0
    %v1500 = vadd.f32 0.0, %v1499
    %1501 = vmatmul.f32.gmra.mxu0 %v1438
    %v1502 = vpop.f32.mrf.mxu0
    %v1503 = vadd.f32 0.0, %v1502
    %1504 = vmatmul.f32.gmra.mxu0 %v1441
    %v1505 = vpop.f32.mrf.mxu0
    %v1506 = vadd.f32 0.0, %v1505
    %1507 = vmatmul.f32.gmra.mxu0 %v1444
    %v1508 = vpop.f32.mrf.mxu0
    %v1509 = vadd.f32 0.0, %v1508
    %1510 = vmatmul.f32.gmra.mxu0 %v1447
    %v1511 = vpop.f32.mrf.mxu0
    %v1512 = vadd.f32 0.0, %v1511
    %1513 = vmatmul.f32.gmra.mxu0 %v1450
    %v1514 = vpop.f32.mrf.mxu0
    %v1515 = vadd.f32 0.0, %v1514
    %1516 = vmatmul.f32.gmra.mxu0 %v1453
    %v1517 = vpop.f32.mrf.mxu0
    %v1518 = vadd.f32 0.0, %v1517
    %1519 = vmatmul.f32.gmra.mxu0 %v1456
    %v1520 = vpop.f32.mrf.mxu0
    %v1521 = vadd.f32 0.0, %v1520
    %1522 = vmatmul.f32.gmra.mxu0 %v1459
    %v1523 = vpop.f32.mrf.mxu0
    %v1524 = vadd.f32 0.0, %v1523
    %1525 = vdwg.mxu0
    %v1526 = vadd.f32 %v1379, %v1380
    %v1527 = vrot.slane %v1526, 4
    %v1528 = vadd.f32 %v1526, %v1527
    %v1529 = vrot.slane %v1528, 2
    %v1530 = vadd.f32 %v1528, %v1529
    %v1531 = vrot.slane %v1530, 1
    %v1532 = vadd.f32 %v1530, %v1531
    %1533 = vmatpush.xpose.msra.mxu0 %v1282
    %1534 = vmatpush.xpose.msra.mxu0 %v1281
    %1535 = vmatpush.xpose.msra.mxu0 %v1280
    %1536 = vmatpush.xpose.msra.mxu0 %v1279
    %1537 = vmatpush.xpose.msra.mxu0 %v1278
    %1538 = vmatpush.xpose.msra.mxu0 %v1277
    %1539 = vmatpush.xpose.msra.mxu0 %v1276
    %1540 = vmatpush.xpose.msra.mxu0 %v1275
    %1541 = vmatpush.xpose.msra.mxu0 %v1274
    %1542 = vmatpush.xpose.msra.mxu0 %v1273
    %1543 = vmatpush.xpose.msra.mxu0 %v1272
    %1544 = vmatpush.xpose.msra.mxu0 %v1271
    %1545 = vmatpush.xpose.msra.mxu0 %v1270
    %1546 = vmatpush.xpose.msra.mxu0 %v1269
    %1547 = vmatpush.xpose.msra.mxu0 %v1268
    %1548 = vmatpush.xpose.msra.mxu0 %v1267
    %1549 = vmatmul.f32.gmra.mxu0 %v1379
    %v1550 = vpop.f32.mrf.mxu0
    %v1551 = vadd.f32 0.0, %v1550
    %1552 = vmatmul.f32.gmra.mxu0 %v1380
    %v1553 = vpop.f32.mrf.mxu0
    %v1554 = vadd.f32 0.0, %v1553
    %1555 = vdwg.mxu0
    %vm1556 = vcmp.gt.f32.partialorder %v1329, 0.0
    %vm1557 = vcmp.gt.f32.partialorder %v1332, 0.0
    %v1558 = vsel %vm1556, %v1551, 0.0
    %v1559 = vsel %vm1557, %v1554, 0.0
    %1560 = vmatpush.msra.mxu0 0.0
    %1561 = vmatpush.msra.mxu0 0.0
    %1562 = vmatpush.msra.mxu0 0.0
    %1563 = vmatpush.msra.mxu0 0.0
    %1564 = vmatpush.msra.mxu0 0.0
    %1565 = vmatpush.msra.mxu0 0.0
    %1566 = vmatpush.msra.mxu0 0.0
    %1567 = vmatpush.msra.mxu0 0.0
    %1568 = vmatpush.msra.mxu0 0.0
    %1569 = vmatpush.msra.mxu0 0.0
    %1570 = vmatpush.msra.mxu0 0.0
    %1571 = vmatpush.msra.mxu0 0.0
    %1572 = vmatpush.msra.mxu0 0.0
    %1573 = vmatpush.msra.mxu0 0.0
    %1574 = vmatpush.msra.mxu0 %v1559
    %1575 = vmatpush.msra.mxu0 %v1558
    %1576 = vmatmul.f32.gmra.mxu0 %v490
    %v1577 = vpop.f32.mrf.mxu0
    %v1578 = vadd.f32 0.0, %v1577
    %1579 = vmatmul.f32.gmra.mxu0 %v493
    %v1580 = vpop.f32.mrf.mxu0
    %v1581 = vadd.f32 0.0, %v1580
    %1582 = vmatmul.f32.gmra.mxu0 %v496
    %v1583 = vpop.f32.mrf.mxu0
    %v1584 = vadd.f32 0.0, %v1583
    %1585 = vmatmul.f32.gmra.mxu0 %v499
    %v1586 = vpop.f32.mrf.mxu0
    %v1587 = vadd.f32 0.0, %v1586
    %1588 = vmatmul.f32.gmra.mxu0 %v502
    %v1589 = vpop.f32.mrf.mxu0
    %v1590 = vadd.f32 0.0, %v1589
    %1591 = vmatmul.f32.gmra.mxu0 %v505
    %v1592 = vpop.f32.mrf.mxu0
    %v1593 = vadd.f32 0.0, %v1592
    %1594 = vmatmul.f32.gmra.mxu0 %v508
    %v1595 = vpop.f32.mrf.mxu0
    %v1596 = vadd.f32 0.0, %v1595
    %1597 = vmatmul.f32.gmra.mxu0 %v511
    %v1598 = vpop.f32.mrf.mxu0
    %v1599 = vadd.f32 0.0, %v1598
    %1600 = vmatmul.f32.gmra.mxu0 %v514
    %v1601 = vpop.f32.mrf.mxu0
    %v1602 = vadd.f32 0.0, %v1601
    %1603 = vmatmul.f32.gmra.mxu0 %v517
    %v1604 = vpop.f32.mrf.mxu0
    %v1605 = vadd.f32 0.0, %v1604
    %1606 = vmatmul.f32.gmra.mxu0 %v520
    %v1607 = vpop.f32.mrf.mxu0
    %v1608 = vadd.f32 0.0, %v1607
    %1609 = vmatmul.f32.gmra.mxu0 %v523
    %v1610 = vpop.f32.mrf.mxu0
    %v1611 = vadd.f32 0.0, %v1610
    %1612 = vmatmul.f32.gmra.mxu0 %v526
    %v1613 = vpop.f32.mrf.mxu0
    %v1614 = vadd.f32 0.0, %v1613
    %1615 = vmatmul.f32.gmra.mxu0 %v529
    %v1616 = vpop.f32.mrf.mxu0
    %v1617 = vadd.f32 0.0, %v1616
    %1618 = vmatmul.f32.gmra.mxu0 %v532
    %v1619 = vpop.f32.mrf.mxu0
    %v1620 = vadd.f32 0.0, %v1619
    %1621 = vmatmul.f32.gmra.mxu0 %v535
    %v1622 = vpop.f32.mrf.mxu0
    %v1623 = vadd.f32 0.0, %v1622
    %1624 = vmatmul.f32.gmra.mxu0 %v538
    %v1625 = vpop.f32.mrf.mxu0
    %v1626 = vadd.f32 0.0, %v1625
    %1627 = vmatmul.f32.gmra.mxu0 %v541
    %v1628 = vpop.f32.mrf.mxu0
    %v1629 = vadd.f32 0.0, %v1628
    %1630 = vmatmul.f32.gmra.mxu0 %v544
    %v1631 = vpop.f32.mrf.mxu0
    %v1632 = vadd.f32 0.0, %v1631
    %1633 = vmatmul.f32.gmra.mxu0 %v547
    %v1634 = vpop.f32.mrf.mxu0
    %v1635 = vadd.f32 0.0, %v1634
    %1636 = vmatmul.f32.gmra.mxu0 %v550
    %v1637 = vpop.f32.mrf.mxu0
    %v1638 = vadd.f32 0.0, %v1637
    %1639 = vmatmul.f32.gmra.mxu0 %v553
    %v1640 = vpop.f32.mrf.mxu0
    %v1641 = vadd.f32 0.0, %v1640
    %1642 = vmatmul.f32.gmra.mxu0 %v556
    %v1643 = vpop.f32.mrf.mxu0
    %v1644 = vadd.f32 0.0, %v1643
    %1645 = vmatmul.f32.gmra.mxu0 %v559
    %v1646 = vpop.f32.mrf.mxu0
    %v1647 = vadd.f32 0.0, %v1646
    %1648 = vmatmul.f32.gmra.mxu0 %v562
    %v1649 = vpop.f32.mrf.mxu0
    %v1650 = vadd.f32 0.0, %v1649
    %1651 = vmatmul.f32.gmra.mxu0 %v565
    %v1652 = vpop.f32.mrf.mxu0
    %v1653 = vadd.f32 0.0, %v1652
    %1654 = vmatmul.f32.gmra.mxu0 %v568
    %v1655 = vpop.f32.mrf.mxu0
    %v1656 = vadd.f32 0.0, %v1655
    %1657 = vmatmul.f32.gmra.mxu0 %v571
    %v1658 = vpop.f32.mrf.mxu0
    %v1659 = vadd.f32 0.0, %v1658
    %1660 = vmatmul.f32.gmra.mxu0 %v574
    %v1661 = vpop.f32.mrf.mxu0
    %v1662 = vadd.f32 0.0, %v1661
    %1663 = vmatmul.f32.gmra.mxu0 %v577
    %v1664 = vpop.f32.mrf.mxu0
    %v1665 = vadd.f32 0.0, %v1664
    %1666 = vmatmul.f32.gmra.mxu0 %v580
    %v1667 = vpop.f32.mrf.mxu0
    %v1668 = vadd.f32 0.0, %v1667
    %1669 = vmatmul.f32.gmra.mxu0 %v583
    %v1670 = vpop.f32.mrf.mxu0
    %v1671 = vadd.f32 0.0, %v1670
    %1672 = vdwg.mxu0
    %v1673 = vadd.f32 %v1558, %v1559
    %v1674 = vrot.slane %v1673, 4
    %v1675 = vadd.f32 %v1673, %v1674
    %v1676 = vrot.slane %v1675, 2
    %v1677 = vadd.f32 %v1675, %v1676
    %v1678 = vrot.slane %v1677, 1
    %v1679 = vadd.f32 %v1677, %v1678
    %v1680 = vmul.f32 %v1578, 0.01
    %v1681 = vmul.f32 %v1581, 0.01
    %v1682 = vmul.f32 %v1584, 0.01
    %v1683 = vmul.f32 %v1587, 0.01
    %v1684 = vmul.f32 %v1590, 0.01
    %v1685 = vmul.f32 %v1593, 0.01
    %v1686 = vmul.f32 %v1596, 0.01
    %v1687 = vmul.f32 %v1599, 0.01
    %v1688 = vmul.f32 %v1602, 0.01
    %v1689 = vmul.f32 %v1605, 0.01
    %v1690 = vmul.f32 %v1608, 0.01
    %v1691 = vmul.f32 %v1611, 0.01
    %v1692 = vmul.f32 %v1614, 0.01
    %v1693 = vmul.f32 %v1617, 0.01
    %v1694 = vmul.f32 %v1620, 0.01
    %v1695 = vmul.f32 %v1623, 0.01
    %v1696 = vmul.f32 %v1626, 0.01
    %v1697 = vmul.f32 %v1629, 0.01
    %v1698 = vmul.f32 %v1632, 0.01
    %v1699 = vmul.f32 %v1635, 0.01
    %v1700 = vmul.f32 %v1638, 0.01
    %v1701 = vmul.f32 %v1641, 0.01
    %v1702 = vmul.f32 %v1644, 0.01
    %v1703 = vmul.f32 %v1647, 0.01
    %v1704 = vmul.f32 %v1650, 0.01
    %v1705 = vmul.f32 %v1653, 0.01
    %v1706 = vmul.f32 %v1656, 0.01
    %v1707 = vmul.f32 %v1659, 0.01
    %v1708 = vmul.f32 %v1662, 0.01
    %v1709 = vmul.f32 %v1665, 0.01
    %v1710 = vmul.f32 %v1668, 0.01
    %v1711 = vmul.f32 %v1671, 0.01
    %v1712 = vsub.f32 %v1217, %v1680
    %v1713 = vsub.f32 %v1218, %v1681
    %v1714 = vsub.f32 %v1219, %v1682
    %v1715 = vsub.f32 %v1220, %v1683
    %v1716 = vsub.f32 %v1221, %v1684
    %v1717 = vsub.f32 %v1222, %v1685
    %v1718 = vsub.f32 %v1223, %v1686
    %v1719 = vsub.f32 %v1224, %v1687
    %v1720 = vsub.f32 %v1225, %v1688
    %v1721 = vsub.f32 %v1226, %v1689
    %v1722 = vsub.f32 %v1227, %v1690
    %v1723 = vsub.f32 %v1228, %v1691
    %v1724 = vsub.f32 %v1229, %v1692
    %v1725 = vsub.f32 %v1230, %v1693
    %v1726 = vsub.f32 %v1231, %v1694
    %v1727 = vsub.f32 %v1232, %v1695
    %v1728 = vsub.f32 %v1233, %v1696
    %v1729 = vsub.f32 %v1234, %v1697
    %v1730 = vsub.f32 %v1235, %v1698
    %v1731 = vsub.f32 %v1236, %v1699
    %v1732 = vsub.f32 %v1237, %v1700
    %v1733 = vsub.f32 %v1238, %v1701
    %v1734 = vsub.f32 %v1239, %v1702
    %v1735 = vsub.f32 %v1240, %v1703
    %v1736 = vsub.f32 %v1241, %v1704
    %v1737 = vsub.f32 %v1242, %v1705
    %v1738 = vsub.f32 %v1243, %v1706
    %v1739 = vsub.f32 %v1244, %v1707
    %v1740 = vsub.f32 %v1245, %v1708
    %v1741 = vsub.f32 %v1246, %v1709
    %v1742 = vsub.f32 %v1247, %v1710
    %v1743 = vsub.f32 %v1248, %v1711
    %v1744 = vmul.f32 %v1679, 0.01
    %v1745 = vsub.f32 %v1250, %v1744
    %v1746 = vmul.f32 %v1479, 0.01
    %v1747 = vmul.f32 %v1482, 0.01
    %v1748 = vmul.f32 %v1485, 0.01
    %v1749 = vmul.f32 %v1488, 0.01
    %v1750 = vmul.f32 %v1491, 0.01
    %v1751 = vmul.f32 %v1494, 0.01
    %v1752 = vmul.f32 %v1497, 0.01
    %v1753 = vmul.f32 %v1500, 0.01
    %v1754 = vmul.f32 %v1503, 0.01
    %v1755 = vmul.f32 %v1506, 0.01
    %v1756 = vmul.f32 %v1509, 0.01
    %v1757 = vmul.f32 %v1512, 0.01
    %v1758 = vmul.f32 %v1515, 0.01
    %v1759 = vmul.f32 %v1518, 0.01
    %v1760 = vmul.f32 %v1521, 0.01
    %v1761 = vmul.f32 %v1524, 0.01
    %v1762 = vsub.f32 %v1267, %v1746
    %v1763 = vsub.f32 %v1268, %v1747
    %v1764 = vsub.f32 %v1269, %v1748
    %v1765 = vsub.f32 %v1270, %v1749
    %v1766 = vsub.f32 %v1271, %v1750
    %v1767 = vsub.f32 %v1272, %v1751
    %v1768 = vsub.f32 %v1273, %v1752
    %v1769 = vsub.f32 %v1274, %v1753
    %v1770 = vsub.f32 %v1275, %v1754
    %v1771 = vsub.f32 %v1276, %v1755
    %v1772 = vsub.f32 %v1277, %v1756
    %v1773 = vsub.f32 %v1278, %v1757
    %v1774 = vsub.f32 %v1279, %v1758
    %v1775 = vsub.f32 %v1280, %v1759
    %v1776 = vsub.f32 %v1281, %v1760
    %v1777 = vsub.f32 %v1282, %v1761
    %v1778 = vmul.f32 %v1532, 0.01
    %v1779 = vsub.f32 %v1284, %v1778
    %v1780 = vld [vmem:[#allocation8] sm:$0xff]
    %v1781 = vld [vmem:[#allocation8 + $0x8] sm:$0xff]
    %v1782 = vld [vmem:[#allocation8 + $0x10] sm:$0xff]
    %v1783 = vld [vmem:[#allocation8 + $0x18] sm:$0xff]
    %v1784 = vld [vmem:[#allocation8 + $0x20] sm:$0xff]
    %v1785 = vld [vmem:[#allocation8 + $0x28] sm:$0xff]
    %v1786 = vld [vmem:[#allocation8 + $0x30] sm:$0xff]
    %v1787 = vld [vmem:[#allocation8 + $0x38] sm:$0xff]
    %v1789 = vperm.slane %v1745, 0
    %1791 = vmatpush.msra.mxu0 %v1727
    %1792 = vmatpush.msra.mxu0 %v1726
    %1793 = vmatpush.msra.mxu0 %v1725
    %1794 = vmatpush.msra.mxu0 %v1724
    %1795 = vmatpush.msra.mxu0 %v1723
    %1796 = vmatpush.msra.mxu0 %v1722
    %1797 = vmatpush.msra.mxu0 %v1721
    %1798 = vmatpush.msra.mxu0 %v1720
    %1799 = vmatpush.msra.mxu0 %v1719
    %1800 = vmatpush.msra.mxu0 %v1718
    %1801 = vmatpush.msra.mxu0 %v1717
    %1802 = vmatpush.msra.mxu0 %v1716
    %1803 = vmatpush.msra.mxu0 %v1715
    %1804 = vmatpush.msra.mxu0 %v1714
    %1805 = vmatpush.msra.mxu0 %v1713
    %1806 = vmatpush.msra.mxu0 %v1712
    %1807 = vmatmul.f32.gmra.mxu0 %v1780
    %v1808 = vpop.f32.mrf.mxu0
    %v1809 = vadd.f32 %v1789, %v1808
    %1810 = vmatmul.f32.gmra.mxu0 %v1782
    %v1811 = vpop.f32.mrf.mxu0
    %v1812 = vadd.f32 %v1789, %v1811
    %1813 = vmatmul.f32.gmra.mxu0 %v1784
    %v1814 = vpop.f32.mrf.mxu0
    %v1815 = vadd.f32 %v1789, %v1814
    %1816 = vmatmul.f32.gmra.mxu0 %v1786
    %v1817 = vpop.f32.mrf.mxu0
    %v1818 = vadd.f32 %v1789, %v1817
    %1819 = vdwg.mxu0
    %1820 = vmatpush.msra.mxu0 %v1743
    %1821 = vmatpush.msra.mxu0 %v1742
    %1822 = vmatpush.msra.mxu0 %v1741
    %1823 = vmatpush.msra.mxu0 %v1740
    %1824 = vmatpush.msra.mxu0 %v1739
    %1825 = vmatpush.msra.mxu0 %v1738
    %1826 = vmatpush.msra.mxu0 %v1737
    %1827 = vmatpush.msra.mxu0 %v1736
    %1828 = vmatpush.msra.mxu0 %v1735
    %1829 = vmatpush.msra.mxu0 %v1734
    %1830 = vmatpush.msra.mxu0 %v1733
    %1831 = vmatpush.msra.mxu0 %v1732
    %1832 = vmatpush.msra.mxu0 %v1731
    %1833 = vmatpush.msra.mxu0 %v1730
    %1834 = vmatpush.msra.mxu0 %v1729
    %1835 = vmatpush.msra.mxu0 %v1728
    %1836 = vmatmul.f32.gmra.mxu0 %v1781
    %v1837 = vpop.f32.mrf.mxu0
    %v1838 = vadd.f32 %v1809, %v1837
    %1839 = vmatmul.f32.gmra.mxu0 %v1783
    %v1840 = vpop.f32.mrf.mxu0
    %v1841 = vadd.f32 %v1812, %v1840
    %1842 = vmatmul.f32.gmra.mxu0 %v1785
    %v1843 = vpop.f32.mrf.mxu0
    %v1844 = vadd.f32 %v1815, %v1843
    %1845 = vmatmul.f32.gmra.mxu0 %v1787
    %v1846 = vpop.f32.mrf.mxu0
    %v1847 = vadd.f32 %v1818, %v1846
    %1848 = vdwg.mxu0
    %v1849 = vmax.f32 %v1838, 0.0
    %v1850 = vmax.f32 %v1841, 0.0
    %v1851 = vmax.f32 %v1844, 0.0
    %v1852 = vmax.f32 %v1847, 0.0
    %v1854 = vperm.slane %v1779, 0
    %1856 = vmatpush.msra.mxu0 %v1777
    %1857 = vmatpush.msra.mxu0 %v1776
    %1858 = vmatpush.msra.mxu0 %v1775
    %1859 = vmatpush.msra.mxu0 %v1774
    %1860 = vmatpush.msra.mxu0 %v1773
    %1861 = vmatpush.msra.mxu0 %v1772
    %1862 = vmatpush.msra.mxu0 %v1771
    %1863 = vmatpush.msra.mxu0 %v1770
    %1864 = vmatpush.msra.mxu0 %v1769
    %1865 = vmatpush.msra.mxu0 %v1768
    %1866 = vmatpush.msra.mxu0 %v1767
    %1867 = vmatpush.msra.mxu0 %v1766
    %1868 = vmatpush.msra.mxu0 %v1765
    %1869 = vmatpush.msra.mxu0 %v1764
    %1870 = vmatpush.msra.mxu0 %v1763
    %1871 = vmatpush.msra.mxu0 %v1762
    %1872 = vmatmul.f32.gmra.mxu0 %v1849
    %v1873 = vpop.f32.mrf.mxu0
    %v1874 = vadd.f32 %v1854, %v1873
    %1875 = vmatmul.f32.gmra.mxu0 %v1850
    %v1876 = vpop.f32.mrf.mxu0
    %v1877 = vadd.f32 %v1854, %v1876
    %1878 = vmatmul.f32.gmra.mxu0 %v1851
    %v1879 = vpop.f32.mrf.mxu0
    %v1880 = vadd.f32 %v1854, %v1879
    %1881 = vmatmul.f32.gmra.mxu0 %v1852
    %v1882 = vpop.f32.mrf.mxu0
    %v1883 = vadd.f32 %v1854, %v1882
    %1884 = vdwg.mxu0
    %1885 = vst [vmem:[#allocation12] sm:$0xff] %v1874
    %1886 = vst [vmem:[#allocation12 + $0x8] sm:$0xff] %v1877
    %1887 = vst [vmem:[#allocation12 + $0x10] sm:$0xff] %v1880
    %1888 = vst [vmem:[#allocation12 + $0x18] sm:$0xff] %v1883
    // Predicated region
    $region50: #{tpu_custom_call.1} parent=1 // pred_check
      _
    $region51: #{tpu_custom_call.1} parent=1 // pred_check_branch
      %1890 = sbr.rel (0) target = $region53
    $region52: #{tpu_custom_call.1} parent=1 // pred_region
      %1892 = vsyncadd [#allocation4], 0
      %s1893 = sshll.u32 [#allocation12], 4
      %s1894 = int_to_ptr.vmem [resolvable:$true] %s1893
      %s1895 = sshll.u32 %s7, 4
      %s1896 = int_to_ptr.hbm [resolvable:$true] %s1895
      %1901 = dma.vmem_to_hbm [thread:$0]  %s1894, 512, %s1896, [#allocation4], 128, 128, 8
    $region53: #{tpu_custom_call.1} parent=1 // pred_fallthru
      _
    // Predicated region
    $region54: #{tpu_custom_call.1} parent=1 // pred_check
      _
    $region55: #{tpu_custom_call.1} parent=1 // pred_check_branch
      %1903 = sbr.rel (0) target = $region57
    $region56: #{tpu_custom_call.1} parent=1 // pred_region
      %1905 = vsyncadd [#allocation5], 0
      %s1907 = sshll.u32 %s8, 4
      %s1908 = int_to_ptr.hbm [resolvable:$true] %s1907
      %1910 = dma.smem_to_hbm [#allocation13], 16, %s1908, [#allocation5]
    $region57: #{tpu_custom_call.1} parent=1 // pred_fallthru
      _
    // Predicated region
    $region58: #{tpu_custom_call.1} parent=1 // pred_check
      _
    $region59: #{tpu_custom_call.1} parent=1 // pred_check_branch
      %1912 = sbr.rel (0) target = $region61
    $region60: #{tpu_custom_call.1} parent=1 // pred_region
      %1914 = dma.done [#allocation4], 512
    $region61: #{tpu_custom_call.1} parent=1 // pred_fallthru
      _
    // Predicated region
    $region62: #{tpu_custom_call.1} parent=1 // pred_check
      _
    $region63: #{tpu_custom_call.1} parent=1 // pred_check_branch
      %1916 = sbr.rel (0) target = $region65
    $region64: #{tpu_custom_call.1} parent=1 // pred_region
      %1918 = dma.done [#allocation5], 16
    $region65: #{tpu_custom_call.1} parent=1 // pred_fallthru
      _
    %1919 = sfence
    %1920 = vsyncpa [#allocation3], 1
    %1921 = vsyncpa [#allocation7], 1
    %1922 = vsyncpa [#allocation10], 1
    %1923 = vsyncpa [#allocation4], 1
    %1924 = vsyncpa [#allocation5], 1

</llo_original>
